<compile_context>
chip_gen: v6e
topology: v6e:2x2x1
jax: 0.10.0
libtpu: 0.0.40
codegen_flags: <defaults>
</compile_context>

<pallas_src>
from functools import partial

import jax
import jax.numpy as jnp
from jax import lax
from jax.experimental import pallas as pl
from jax.experimental.pallas import tpu as pltpu

EXPANSION = 2          # BottleneckX.expansion (unused by forward math)
CARDINALITY = 32       # BottleneckX.cardinality (groups of conv2)
BN_EPS = 1e-5          # torch.nn.BatchNorm2d default eps


# ----------------------------------------------------------------------------
# Pallas kernel: whole BottleneckX forward for a block of NB images.
# ----------------------------------------------------------------------------
def bottleneckx_kernel(x_ref, w1_ref, w2_ref, w3_ref, bias_ref, out_ref):
    # x_ref / out_ref : (NB, H, W, C)  NHWC block (NB images per program), f32
    # w1_ref          : (Cin,  Cmid)   bf16, BN1 scale folded into columns
    # w2_ref          : (9*Cmid, Cmid) bf16, dense block-diagonal tap-major
    #                                  grouped-3x3 weight, BN2 scale folded in
    # w3_ref          : (Cmid, Cout)   bf16, BN3 scale folded into columns
    # bias_ref        : (3, C)         f32 folded BN biases [b1; b2; b3]
    NB, H, W, Cin = x_ref.shape
    Cmid = w1_ref.shape[1]
    Cout = w3_ref.shape[1]
    R = NB * H * W                                   # matmul M dimension

    # ---- conv1 (1x1, BN1 scale pre-folded) + bias + relu --------------------
    x2d = x_ref[...].reshape(R, Cin)                 # layout-preserving view
    h1 = jnp.dot(x2d.astype(jnp.bfloat16), w1_ref[...],
                 preferred_element_type=jnp.float32)
    h1 = jnp.maximum(h1 + bias_ref[0:1, :], 0.0)

    # ---- conv2: grouped 3x3 (stride=1, pad=dilation=1) as ONE K=9*Cmid matmul
    # dy shifts: static slices of an H-padded view (zero rows handle the top /
    # bottom boundary, so no dy masks are needed).
    h1_4d = h1.reshape(NB, H, W, Cmid)
    zrow = jnp.zeros((NB, 1, W, Cmid), jnp.float32)
    hpad = jnp.concatenate([zrow, h1_4d, zrow], axis=1)    # (NB, H+2, W, Cmid)

    # dx validity masks (target column w+dx must exist within the row).
    w_coord = lax.broadcasted_iota(jnp.int32, (R, Cmid), 0) % W
    valid_l = w_coord >= 1          # dx = -1
    valid_r = w_coord < (W - 1)     # dx = +1

    taps = []
    for dy in (-1, 0, 1):                            # static unroll: 3x3 taps
        # whole-vreg re-indexing along H (batch axis of the tile layout)
        slab = hpad[:, dy + 1:dy + 1 + H, :, :].reshape(R, Cmid)
        for dx in (-1, 0, 1):
            if dx == 0:
                tap = slab
            else:
                # tap[r] = slab[r + dx]  (wrap-around rows are masked below);
                # sublane rotate on the XLU, no misaligned slices.
                tap = pltpu.roll(slab, shift=(-dx) % R, axis=0)
                tap = jnp.where(valid_l if dx == -1 else valid_r, tap, 0.0)
            taps.append(tap.astype(jnp.bfloat16))
    kbig = jnp.concatenate(taps, axis=1)             # (R, 9*Cmid) bf16, lanes
    h2 = jnp.dot(kbig, w2_ref[...], preferred_element_type=jnp.float32)
    h2 = jnp.maximum(h2 + bias_ref[1:2, :], 0.0)

    # ---- conv3 (1x1) + bias + residual + relu (residual = x, stride=1) ------
    o = jnp.dot(h2.astype(jnp.bfloat16), w3_ref[...],
                preferred_element_type=jnp.float32)
    o = o + bias_ref[2:3, :]
    res = x_ref[...].reshape(R, Cout)                # re-read residual late
    o = jnp.maximum(o + res, 0.0)
    out_ref[...] = o.reshape(NB, H, W, Cout)


# ----------------------------------------------------------------------------
# Parameter preparation (glue, plain JAX)
# ----------------------------------------------------------------------------
def fold_bn(gamma, beta, mean, var):
    scale = gamma / jnp.sqrt(var + BN_EPS)
    return scale, beta - mean * scale                # (C,), (C,)


def expand_grouped_weight(w2g, groups):
    """torch grouped OIHW weight (Cmid, Cmid//G, 3, 3) -> dense (9, Cin, Cout)
    block-diagonal per-tap matrices (exactly equivalent to the grouped conv)."""
    cmid = w2g.shape[0]
    cg = cmid // groups
    dense = jnp.zeros((9, cmid, cmid), jnp.float32)
    for g in range(groups):
        blk = w2g[g * cg:(g + 1) * cg]                             # (cg_o, cg_i, 3, 3)
        blk = jnp.transpose(blk, (2, 3, 1, 0)).reshape(9, cg, cg)  # (tap, in, out)
        dense = dense.at[:, g * cg:(g + 1) * cg, g * cg:(g + 1) * cg].set(blk)
    return dense


@partial(jax.jit, static_argnames=("grid_blocks",))
def bottleneckx_forward(x_nchw, params, grid_blocks=1):
    # grid_blocks=1: one program, M = N*H*W (best for v5e/v6e).
    # grid_blocks=2 on v7x so both TensorCores get one image block.
    N, Cin, H, W = x_nchw.shape
    Cmid = params["w1"].shape[0]
    Cout = params["w3"].shape[0]
    assert Cin == Cout == Cmid, "identity residual requires fan_in == fan_out"
    assert N % grid_blocks == 0
    NB = N // grid_blocks

    s1, b1 = fold_bn(params["g1"], params["b1"], params["m1"], params["v1"])
    s2, b2 = fold_bn(params["g2"], params["b2"], params["m2"], params["v2"])
    s3, b3 = fold_bn(params["g3"], params["b3"], params["m3"], params["v3"])

    # Fold BN scales into the weight output-columns, cast MXU operands to bf16.
    w1m = (jnp.transpose(params["w1"][:, :, 0, 0], (1, 0))
           * s1[None, :]).astype(jnp.bfloat16)                       # (Cin, Cmid)
    w2m = (expand_grouped_weight(params["w2"], CARDINALITY)
           * s2[None, None, :]).reshape(9 * Cmid, Cmid).astype(jnp.bfloat16)
    w3m = (jnp.transpose(params["w3"][:, :, 0, 0], (1, 0))
           * s3[None, :]).astype(jnp.bfloat16)                       # (Cmid, Cout)
    bias = jnp.stack([b1, b2, b3], axis=0).astype(jnp.float32)       # (3, C)

    x_nhwc = jnp.transpose(x_nchw, (0, 2, 3, 1))                     # NCHW -> NHWC

    flops = 2 * N * H * W * (Cin * Cmid + 9 * Cmid * Cmid + Cmid * Cout)
    bytes_accessed = (4 * N * H * W * (Cin + Cout)                   # f32 acts
                      + 2 * (Cin * Cmid + 9 * Cmid * Cmid + Cmid * Cout)
                      + 4 * 3 * Cout)
    cost = pl.CostEstimate(flops=flops, transcendentals=0,
                           bytes_accessed=bytes_accessed)

    out_nhwc = pl.pallas_call(
        bottleneckx_kernel,
        out_shape=jax.ShapeDtypeStruct((N, H, W, Cout), jnp.float32),
        grid=(grid_blocks,),
        in_specs=[
            pl.BlockSpec((NB, H, W, Cin), lambda n: (n, 0, 0, 0)),    # x
            pl.BlockSpec((Cin, Cmid),      lambda n: (0, 0)),         # w1 (bf16)
            pl.BlockSpec((9 * Cmid, Cmid), lambda n: (0, 0)),         # w2 (bf16)
            pl.BlockSpec((Cmid, Cout),     lambda n: (0, 0)),         # w3 (bf16)
            pl.BlockSpec((3, Cout),        lambda n: (0, 0)),         # biases
        ],
        out_specs=pl.BlockSpec((NB, H, W, Cout), lambda n: (n, 0, 0, 0)),
        compiler_params=pltpu.CompilerParams(
            dimension_semantics=("parallel",)),
        cost_estimate=cost,
    )(x_nhwc, w1m, w2m, w3m, bias)

    return jnp.transpose(out_nhwc, (0, 3, 1, 2))                      # NHWC -> NCHW


# ----------------------------------------------------------------------------
# Deterministic synthetic parameters (shapes from BottleneckX.__init__)
# ----------------------------------------------------------------------------
def init_params(key, fan_in, fan_out):
    bottle = fan_out * CARDINALITY // 32
    cg = bottle // CARDINALITY
    ks = jax.random.split(key, 15)

    def nrm(k, shape, scale):
        return scale * jax.random.normal(k, shape, jnp.float32)

    def bn_params(kg, kb, km, kv, c):
        return (1.0 + 0.1 * jax.random.normal(kg, (c,), jnp.float32),
                0.1 * jax.random.normal(kb, (c,), jnp.float32),
                0.1 * jax.random.normal(km, (c,), jnp.float32),
                1.0 + 0.1 * jnp.abs(jax.random.normal(kv, (c,), jnp.float32)))

    g1, b1, m1, v1 = bn_params(ks[1], ks[2], ks[3], ks[4], bottle)
    g2, b2, m2, v2 = bn_params(ks[6], ks[7], ks[8], ks[9], bottle)
    g3, b3, m3, v3 = bn_params(ks[11], ks[12], ks[13], ks[14], fan_out)
    return dict(
        w1=nrm(ks[0], (bottle, fan_in, 1, 1), 0.05),
        g1=g1, b1=b1, m1=m1, v1=v1,
        w2=nrm(ks[5], (bottle, cg, 3, 3), 0.1),
        g2=g2, b2=b2, m2=m2, v2=v2,
        w3=nrm(ks[10], (fan_out, bottle, 1, 1), 0.05),
        g3=g3, b3=b3, m3=m3, v3=v3,
    )


# ----------------------------------------------------------------------------
# Plain-JAX reference (mirrors the PyTorch forward, BN in inference mode)
# ----------------------------------------------------------------------------
def reference_forward(x, params):
    def conv(x, w, groups=1, padding=0):
        return lax.conv_general_dilated(
            x, w, window_strides=(1, 1),
            padding=[(padding, padding), (padding, padding)],
            feature_group_count=groups,
            dimension_numbers=("NCHW", "OIHW", "NCHW"),
            precision=lax.Precision.HIGHEST)

    def bn(x, g, b, m, v):
        s = g / jnp.sqrt(v + BN_EPS)
        return x * s[None, :, None, None] + (b - m * s)[None, :, None, None]

    residual = x
    out = jax.nn.relu(bn(conv(x, params["w1"]),
                         params["g1"], params["b1"], params["m1"], params["v1"]))
    out = jax.nn.relu(bn(conv(out, params["w2"], groups=CARDINALITY, padding=1),
                         params["g2"], params["b2"], params["m2"], params["v2"]))
    out = bn(conv(out, params["w3"]),
             params["g3"], params["b3"], params["m3"], params["v3"])
    return jax.nn.relu(out + residual)


if __name__ == "__main__":
    key = jax.random.PRNGKey(0)
    kx, kp = jax.random.split(key)

    # fan_in == fan_out == 128, stride=1, dilation=1 (identity residual);
    # bottle_planes = fan_out * 32 // 32 = 128, groups = 32 (4 channels/group).
    N, C, H, W = 2, 128, 8, 8
    x = jax.random.normal(kx, (N, C, H, W), jnp.float32)
    params = init_params(kp, C, C)

    out = bottleneckx_forward(x, params)          # grid_blocks=1 -> M = 128 rows
    out = jax.block_until_ready(out)

    ref = reference_forward(x, params)
    assert out.shape == (N, C, H, W)
    max_err = float(jnp.max(jnp.abs(out - ref)))
    # bf16 MXU operands with f32 accumulation -> bf16-level tolerance.
    if not jnp.allclose(out, ref, rtol=2e-2, atol=2e-2):
        raise AssertionError(f"Pallas kernel mismatch, max abs err = {max_err}")
    print("KERNEL_OK")
</pallas_src>

<mosaic_0001>
module attributes {stable_mosaic.version = 11 : i64} {
  func.func @bottleneckx_kernel(%arg0: i32, %arg1: memref<2x8x8x128xf32, #tpu.memory_space<vmem>>, %arg2: memref<128x128xbf16, #tpu.memory_space<vmem>>, %arg3: memref<1152x128xbf16, #tpu.memory_space<vmem>>, %arg4: memref<128x128xbf16, #tpu.memory_space<vmem>>, %arg5: memref<3x128xf32, #tpu.memory_space<vmem>>, %arg6: memref<2x8x8x128xf32, #tpu.memory_space<vmem>>) attributes {dimension_semantics = [#tpu.dimension_semantics<parallel>], iteration_bounds = array<i64: 1>, scalar_prefetch = 0 : i64, scratch_operands = 0 : i64, tpu.core_type = #tpu.core_type<tc>, window_params = [{transform_indices = @transform_0, window_bounds = array<i64: 2, 8, 8, 128>}, {pipeline_mode = #tpu.pipeline_mode<synchronous>, transform_indices = @transform_1, window_bounds = array<i64: 128, 128>}, {pipeline_mode = #tpu.pipeline_mode<synchronous>, transform_indices = @transform_2, window_bounds = array<i64: 1152, 128>}, {pipeline_mode = #tpu.pipeline_mode<synchronous>, transform_indices = @transform_3, window_bounds = array<i64: 128, 128>}, {pipeline_mode = #tpu.pipeline_mode<synchronous>, transform_indices = @transform_4, window_bounds = array<i64: 3, 128>}, {transform_indices = @transform_5, window_bounds = array<i64: 2, 8, 8, 128>}]} {
    %c0 = arith.constant 0 : index
    %c0_0 = arith.constant 0 : index
    %c0_1 = arith.constant 0 : index
    %c0_2 = arith.constant 0 : index
    %0 = vector.load %arg1[%c0, %c0_0, %c0_1, %c0_2] : memref<2x8x8x128xf32, #tpu.memory_space<vmem>>, vector<2x8x8x128xf32>
    %1 = vector.shape_cast %0 : vector<2x8x8x128xf32> to vector<128x128xf32>
    %2 = arith.truncf %1 : vector<128x128xf32> to vector<128x128xbf16>
    %c0_3 = arith.constant 0 : index
    %c0_4 = arith.constant 0 : index
    %3 = vector.load %arg2[%c0_3, %c0_4] : memref<128x128xbf16, #tpu.memory_space<vmem>>, vector<128x128xbf16>
    %cst = arith.constant dense<0.000000e+00> : vector<128x128xf32>
    %4 = tpu.matmul %2, %3, %cst {dimension_numbers = #tpu.dot_dimension_numbers<[1], [0], [0], [1], [0, 0, 1, 1], [], []>} : vector<128x128xbf16>, vector<128x128xbf16>, vector<128x128xf32> -> vector<128x128xf32>
    %c0_5 = arith.constant 0 : index
    %c0_6 = arith.constant 0 : index
    %5 = vector.load %arg5[%c0_5, %c0_6] : memref<3x128xf32, #tpu.memory_space<vmem>>, vector<1x128xf32>
    %6 = vector.broadcast %5 : vector<1x128xf32> to vector<128x128xf32>
    %7 = arith.addf %4, %6 : vector<128x128xf32>
    %cst_7 = arith.constant 0.000000e+00 : f32
    %8 = vector.broadcast %cst_7 : f32 to vector<128x128xf32>
    %9 = arith.maximumf %7, %8 : vector<128x128xf32>
    %10 = vector.shape_cast %9 : vector<128x128xf32> to vector<2x8x8x128xf32>
    %cst_8 = arith.constant 0.000000e+00 : f32
    %11 = vector.broadcast %cst_8 : f32 to vector<2x1x8x128xf32>
    %12 = tpu.concatenate %11, %10, %11 in 1 : vector<2x1x8x128xf32>, vector<2x8x8x128xf32>, vector<2x1x8x128xf32> -> vector<2x10x8x128xf32>
    %13 = tpu.iota {dimensions = array<i32: 0>} : vector<128x128xi32>
    %c8_i32 = arith.constant 8 : i32
    %c0_i32 = arith.constant 0 : i32
    %14 = arith.cmpi eq, %c8_i32, %c0_i32 : i32
    %c1_i32 = arith.constant 1 : i32
    %15 = arith.select %14, %c1_i32, %c8_i32 : i32
    %16 = vector.broadcast %15 : i32 to vector<128x128xi32>
    %17 = arith.remsi %13, %16 : vector<128x128xi32>
    %c0_i32_9 = arith.constant 0 : i32
    %18 = vector.broadcast %c0_i32_9 : i32 to vector<128x128xi32>
    %19 = arith.cmpi ne, %17, %18 : vector<128x128xi32>
    %c0_i32_10 = arith.constant 0 : i32
    %20 = vector.broadcast %c0_i32_10 : i32 to vector<128x128xi32>
    %21 = arith.cmpi slt, %17, %20 : vector<128x128xi32>
    %c0_i32_11 = arith.constant 0 : i32
    %22 = arith.cmpi slt, %15, %c0_i32_11 : i32
    %23 = vector.broadcast %22 : i1 to vector<128x128xi1>
    %24 = vector.broadcast %23 : vector<128x128xi1> to vector<128x128xi1>
    %25 = arith.xori %21, %24 : vector<128x128xi1>
    %26 = arith.andi %25, %19 : vector<128x128xi1>
    %27 = vector.broadcast %15 : i32 to vector<128x128xi32>
    %28 = arith.addi %17, %27 : vector<128x128xi32>
    %29 = arith.select %26, %28, %17 : vector<128x128xi1>, vector<128x128xi32>
    %c1_i32_12 = arith.constant 1 : i32
    %30 = vector.broadcast %c1_i32_12 : i32 to vector<128x128xi32>
    %31 = arith.cmpi sge, %29, %30 : vector<128x128xi32>
    %c7_i32 = arith.constant 7 : i32
    %32 = vector.broadcast %c7_i32 : i32 to vector<128x128xi32>
    %33 = arith.cmpi slt, %29, %32 : vector<128x128xi32>
    %34 = vector.extract_strided_slice %12 {offsets = [0, 0, 0, 0], sizes = [2, 8, 8, 128], strides = [1, 1, 1, 1]} : vector<2x10x8x128xf32> to vector<2x8x8x128xf32>
    %35 = vector.shape_cast %34 : vector<2x8x8x128xf32> to vector<128x128xf32>
    %c1_i32_13 = arith.constant 1 : i32
    %36 = tpu.dynamic_rotate %35 by %c1_i32_13 dim 0 : vector<128x128xf32>, i32 -> vector<128x128xf32>
    %cst_14 = arith.constant 0.000000e+00 : f32
    %37 = vector.broadcast %cst_14 : f32 to vector<128x128xf32>
    %38 = arith.select %31, %36, %37 : vector<128x128xi1>, vector<128x128xf32>
    %39 = arith.truncf %38 : vector<128x128xf32> to vector<128x128xbf16>
    %40 = arith.truncf %35 : vector<128x128xf32> to vector<128x128xbf16>
    %c127_i32 = arith.constant 127 : i32
    %41 = tpu.dynamic_rotate %35 by %c127_i32 dim 0 : vector<128x128xf32>, i32 -> vector<128x128xf32>
    %cst_15 = arith.constant 0.000000e+00 : f32
    %42 = vector.broadcast %cst_15 : f32 to vector<128x128xf32>
    %43 = arith.select %33, %41, %42 : vector<128x128xi1>, vector<128x128xf32>
    %44 = arith.truncf %43 : vector<128x128xf32> to vector<128x128xbf16>
    %45 = vector.extract_strided_slice %12 {offsets = [0, 1, 0, 0], sizes = [2, 8, 8, 128], strides = [1, 1, 1, 1]} : vector<2x10x8x128xf32> to vector<2x8x8x128xf32>
    %46 = vector.shape_cast %45 : vector<2x8x8x128xf32> to vector<128x128xf32>
    %c1_i32_16 = arith.constant 1 : i32
    %47 = tpu.dynamic_rotate %46 by %c1_i32_16 dim 0 : vector<128x128xf32>, i32 -> vector<128x128xf32>
    %cst_17 = arith.constant 0.000000e+00 : f32
    %48 = vector.broadcast %cst_17 : f32 to vector<128x128xf32>
    %49 = arith.select %31, %47, %48 : vector<128x128xi1>, vector<128x128xf32>
    %50 = arith.truncf %49 : vector<128x128xf32> to vector<128x128xbf16>
    %51 = arith.truncf %46 : vector<128x128xf32> to vector<128x128xbf16>
    %c127_i32_18 = arith.constant 127 : i32
    %52 = tpu.dynamic_rotate %46 by %c127_i32_18 dim 0 : vector<128x128xf32>, i32 -> vector<128x128xf32>
    %cst_19 = arith.constant 0.000000e+00 : f32
    %53 = vector.broadcast %cst_19 : f32 to vector<128x128xf32>
    %54 = arith.select %33, %52, %53 : vector<128x128xi1>, vector<128x128xf32>
    %55 = arith.truncf %54 : vector<128x128xf32> to vector<128x128xbf16>
    %56 = vector.extract_strided_slice %12 {offsets = [0, 2, 0, 0], sizes = [2, 8, 8, 128], strides = [1, 1, 1, 1]} : vector<2x10x8x128xf32> to vector<2x8x8x128xf32>
    %57 = vector.shape_cast %56 : vector<2x8x8x128xf32> to vector<128x128xf32>
    %c1_i32_20 = arith.constant 1 : i32
    %58 = tpu.dynamic_rotate %57 by %c1_i32_20 dim 0 : vector<128x128xf32>, i32 -> vector<128x128xf32>
    %cst_21 = arith.constant 0.000000e+00 : f32
    %59 = vector.broadcast %cst_21 : f32 to vector<128x128xf32>
    %60 = arith.select %31, %58, %59 : vector<128x128xi1>, vector<128x128xf32>
    %61 = arith.truncf %60 : vector<128x128xf32> to vector<128x128xbf16>
    %62 = arith.truncf %57 : vector<128x128xf32> to vector<128x128xbf16>
    %c127_i32_22 = arith.constant 127 : i32
    %63 = tpu.dynamic_rotate %57 by %c127_i32_22 dim 0 : vector<128x128xf32>, i32 -> vector<128x128xf32>
    %cst_23 = arith.constant 0.000000e+00 : f32
    %64 = vector.broadcast %cst_23 : f32 to vector<128x128xf32>
    %65 = arith.select %33, %63, %64 : vector<128x128xi1>, vector<128x128xf32>
    %66 = arith.truncf %65 : vector<128x128xf32> to vector<128x128xbf16>
    %67 = tpu.concatenate %39, %40, %44, %50, %51, %55, %61, %62, %66 in 1 : vector<128x128xbf16>, vector<128x128xbf16>, vector<128x128xbf16>, vector<128x128xbf16>, vector<128x128xbf16>, vector<128x128xbf16>, vector<128x128xbf16>, vector<128x128xbf16>, vector<128x128xbf16> -> vector<128x1152xbf16>
    %c0_24 = arith.constant 0 : index
    %c0_25 = arith.constant 0 : index
    %68 = vector.load %arg3[%c0_24, %c0_25] : memref<1152x128xbf16, #tpu.memory_space<vmem>>, vector<1152x128xbf16>
    %cst_26 = arith.constant dense<0.000000e+00> : vector<128x128xf32>
    %69 = tpu.matmul %67, %68, %cst_26 {dimension_numbers = #tpu.dot_dimension_numbers<[1], [0], [0], [1], [0, 0, 1, 1], [], []>} : vector<128x1152xbf16>, vector<1152x128xbf16>, vector<128x128xf32> -> vector<128x128xf32>
    %c1 = arith.constant 1 : index
    %c0_27 = arith.constant 0 : index
    %70 = vector.load %arg5[%c1, %c0_27] : memref<3x128xf32, #tpu.memory_space<vmem>>, vector<1x128xf32>
    %71 = vector.broadcast %70 : vector<1x128xf32> to vector<128x128xf32>
    %72 = arith.addf %69, %71 : vector<128x128xf32>
    %cst_28 = arith.constant 0.000000e+00 : f32
    %73 = vector.broadcast %cst_28 : f32 to vector<128x128xf32>
    %74 = arith.maximumf %72, %73 : vector<128x128xf32>
    %75 = arith.truncf %74 : vector<128x128xf32> to vector<128x128xbf16>
    %c0_29 = arith.constant 0 : index
    %c0_30 = arith.constant 0 : index
    %76 = vector.load %arg4[%c0_29, %c0_30] : memref<128x128xbf16, #tpu.memory_space<vmem>>, vector<128x128xbf16>
    %cst_31 = arith.constant dense<0.000000e+00> : vector<128x128xf32>
    %77 = tpu.matmul %75, %76, %cst_31 {dimension_numbers = #tpu.dot_dimension_numbers<[1], [0], [0], [1], [0, 0, 1, 1], [], []>} : vector<128x128xbf16>, vector<128x128xbf16>, vector<128x128xf32> -> vector<128x128xf32>
    %c2 = arith.constant 2 : index
    %c0_32 = arith.constant 0 : index
    %78 = vector.load %arg5[%c2, %c0_32] : memref<3x128xf32, #tpu.memory_space<vmem>>, vector<1x128xf32>
    %79 = vector.broadcast %78 : vector<1x128xf32> to vector<128x128xf32>
    %80 = arith.addf %77, %79 : vector<128x128xf32>
    %c0_33 = arith.constant 0 : index
    %c0_34 = arith.constant 0 : index
    %c0_35 = arith.constant 0 : index
    %c0_36 = arith.constant 0 : index
    %81 = vector.load %arg1[%c0_33, %c0_34, %c0_35, %c0_36] : memref<2x8x8x128xf32, #tpu.memory_space<vmem>>, vector<2x8x8x128xf32>
    %82 = vector.shape_cast %81 : vector<2x8x8x128xf32> to vector<128x128xf32>
    %83 = arith.addf %80, %82 : vector<128x128xf32>
    %cst_37 = arith.constant 0.000000e+00 : f32
    %84 = vector.broadcast %cst_37 : f32 to vector<128x128xf32>
    %85 = arith.maximumf %83, %84 : vector<128x128xf32>
    %86 = vector.shape_cast %85 : vector<128x128xf32> to vector<2x8x8x128xf32>
    %c0_38 = arith.constant 0 : index
    %c0_39 = arith.constant 0 : index
    %c0_40 = arith.constant 0 : index
    %c0_41 = arith.constant 0 : index
    %87 = vector.load %arg6[%c0_38, %c0_39, %c0_40, %c0_41] : memref<2x8x8x128xf32, #tpu.memory_space<vmem>>, vector<2x8x8x128xf32>
    tpu.vector_store %arg6[%c0_38, %c0_39, %c0_40, %c0_41], %86 {strides = array<i32>} : memref<2x8x8x128xf32, #tpu.memory_space<vmem>>, vector<2x8x8x128xf32>,
    return
  }
  func.func @transform_0(%arg0: i32) -> (i32, i32, i32, i32) {
    %c0_i32 = arith.constant 0 : i32
    %c0_i32_0 = arith.constant 0 : i32
    %c0_i32_1 = arith.constant 0 : i32
    %c0_i32_2 = arith.constant 0 : i32
    return %arg0, %c0_i32, %c0_i32_0, %c0_i32_1 : i32, i32, i32, i32
  }
  func.func @transform_1(%arg0: i32) -> (i32, i32) {
    %c0_i32 = arith.constant 0 : i32
    %c0_i32_0 = arith.constant 0 : i32
    %c0_i32_1 = arith.constant 0 : i32
    return %c0_i32, %c0_i32_0 : i32, i32
  }
  func.func @transform_2(%arg0: i32) -> (i32, i32) {
    %c0_i32 = arith.constant 0 : i32
    %c0_i32_0 = arith.constant 0 : i32
    %c0_i32_1 = arith.constant 0 : i32
    return %c0_i32, %c0_i32_0 : i32, i32
  }
  func.func @transform_3(%arg0: i32) -> (i32, i32) {
    %c0_i32 = arith.constant 0 : i32
    %c0_i32_0 = arith.constant 0 : i32
    %c0_i32_1 = arith.constant 0 : i32
    return %c0_i32, %c0_i32_0 : i32, i32
  }
  func.func @transform_4(%arg0: i32) -> (i32, i32) {
    %c0_i32 = arith.constant 0 : i32
    %c0_i32_0 = arith.constant 0 : i32
    %c0_i32_1 = arith.constant 0 : i32
    return %c0_i32, %c0_i32_0 : i32, i32
  }
  func.func @transform_5(%arg0: i32) -> (i32, i32, i32, i32) {
    %c0_i32 = arith.constant 0 : i32
    %c0_i32_0 = arith.constant 0 : i32
    %c0_i32_1 = arith.constant 0 : i32
    %c0_i32_2 = arith.constant 0 : i32
    return %arg0, %c0_i32, %c0_i32_0, %c0_i32_1 : i32, i32, i32, i32
  }
}

</mosaic_0001>

<llo_original>
// kernel: bottleneckx_forward.1
$region0: #{bottleneckx_forward.1}
  #allocation0 [shape = 'u32[]', space=smem, size = 0x4, offset = 0x4, fixed_abs, tag = 'smem constant byte address 0x4 - core index']
  #allocation1 [shape = 'u32[144,128]{1,0:T(1,128)}', space=vmem, size = 0x12000, scoped, tag = 'internal scratch']
  %s0 = inlined_call_operand.vmem [shape: f32[2,8,8,128], index: 0, kind: input, shape index: {}]
  %s1 = inlined_call_operand.vmem [shape: bf16[128,128], index: 1, kind: input, shape index: {}]
  %s2 = inlined_call_operand.vmem [shape: bf16[1152,128], index: 2, kind: input, shape index: {}]
  %s3 = inlined_call_operand.vmem [shape: bf16[128,128], index: 3, kind: input, shape index: {}]
  %s4 = inlined_call_operand.vmem [shape: f32[3,128], index: 4, kind: input, shape index: {}]
  %s5 = inlined_call_operand.hbm [shape: f32[2,8,8,128], index: 5, kind: output, shape index: {}]
  %s6 = sld [smem:[#allocation0]]
  $region30: #{bottleneckx_forward.1} parent=0
    _
  %s8 = ssub.s32 1, %s6
  %s9 = scalar_select 0, %s8, %s6
  $region1: #{bottleneckx_forward.1} parent=0
    #allocation2 [shape = 'u8[65536]{0}', space=vmem, size = 0x10000, scoped, tag = 'output window, operand 0, single buffered']
    #allocation3 [shape = 's32[1]{0}', space=sflag, size = 0x4, scoped, tag = 'scoped memory for bottleneckx_forward.1']
    %10 = vsyncpa [#allocation3], 0
    // Predicated region
    $region2: #{bottleneckx_forward.1} parent=1 // pred_check
      _
    $region3: #{bottleneckx_forward.1} parent=1 // pred_check_branch
      %12 = sbr.rel (0) target = $region5
    $region4: #{bottleneckx_forward.1} parent=1 // pred_region
      _
    $region5: #{bottleneckx_forward.1} parent=1 // pred_fallthru
      _
    // Predicated region
    $region6: #{bottleneckx_forward.1} parent=1 // pred_check
      _
    $region7: #{bottleneckx_forward.1} parent=1 // pred_check_branch
      %14 = sbr.rel (0) target = $region9
    $region8: #{bottleneckx_forward.1} parent=1 // pred_region
      _
    $region9: #{bottleneckx_forward.1} parent=1 // pred_fallthru
      _
    // Predicated region
    $region10: #{bottleneckx_forward.1} parent=1 // pred_check
      _
    $region11: #{bottleneckx_forward.1} parent=1 // pred_check_branch
      %16 = sbr.rel (0) target = $region13
    $region12: #{bottleneckx_forward.1} parent=1 // pred_region
      _
    $region13: #{bottleneckx_forward.1} parent=1 // pred_fallthru
      _
    // Predicated region
    $region14: #{bottleneckx_forward.1} parent=1 // pred_check
      _
    $region15: #{bottleneckx_forward.1} parent=1 // pred_check_branch
      %18 = sbr.rel (0) target = $region17
    $region16: #{bottleneckx_forward.1} parent=1 // pred_region
      _
    $region17: #{bottleneckx_forward.1} parent=1 // pred_fallthru
      _
    // Predicated region
    $region18: #{bottleneckx_forward.1} parent=1 // pred_check
      _
    $region19: #{bottleneckx_forward.1} parent=1 // pred_check_branch
      %20 = sbr.rel (0) target = $region21
    $region20: #{bottleneckx_forward.1} parent=1 // pred_region
      _
    $region21: #{bottleneckx_forward.1} parent=1 // pred_fallthru
      _
    %v22 = vld [vmem:[%s0] sm:$0xff]
    %v23 = vld [vmem:[%s0 + $0x8] sm:$0xff]
    %v24 = vld [vmem:[%s0 + $0x10] sm:$0xff]
    %v25 = vld [vmem:[%s0 + $0x18] sm:$0xff]
    %v26 = vld [vmem:[%s0 + $0x20] sm:$0xff]
    %v27 = vld [vmem:[%s0 + $0x28] sm:$0xff]
    %v28 = vld [vmem:[%s0 + $0x30] sm:$0xff]
    %v29 = vld [vmem:[%s0 + $0x38] sm:$0xff]
    %v30 = vld [vmem:[%s0 + $0x40] sm:$0xff]
    %v31 = vld [vmem:[%s0 + $0x48] sm:$0xff]
    %v32 = vld [vmem:[%s0 + $0x50] sm:$0xff]
    %v33 = vld [vmem:[%s0 + $0x58] sm:$0xff]
    %v34 = vld [vmem:[%s0 + $0x60] sm:$0xff]
    %v35 = vld [vmem:[%s0 + $0x68] sm:$0xff]
    %v36 = vld [vmem:[%s0 + $0x70] sm:$0xff]
    %v37 = vld [vmem:[%s0 + $0x78] sm:$0xff]
    %v38 = vpack.c.bf16 %v23, %v22
    %v39 = vpack.c.bf16 %v25, %v24
    %v40 = vpack.c.bf16 %v27, %v26
    %v41 = vpack.c.bf16 %v29, %v28
    %v42 = vpack.c.bf16 %v31, %v30
    %v43 = vpack.c.bf16 %v33, %v32
    %v44 = vpack.c.bf16 %v35, %v34
    %v45 = vpack.c.bf16 %v37, %v36
    %v46 = vld [vmem:[%s1] sm:$0xf]
    %v47 = vld [vmem:[%s1 + $0x4] sm:$0xf]
    %v48 = vld [vmem:[%s1 + $0x8] sm:$0xf]
    %v49 = vld [vmem:[%s1 + $0xc] sm:$0xf]
    %v50 = vld [vmem:[%s1 + $0x10] sm:$0xf]
    %v51 = vld [vmem:[%s1 + $0x14] sm:$0xf]
    %v52 = vld [vmem:[%s1 + $0x18] sm:$0xf]
    %v53 = vld [vmem:[%s1 + $0x1c] sm:$0xf]
    %v54 = vld [vmem:[%s1 + $0x20] sm:$0xf]
    %v55 = vld [vmem:[%s1 + $0x24] sm:$0xf]
    %v56 = vld [vmem:[%s1 + $0x28] sm:$0xf]
    %v57 = vld [vmem:[%s1 + $0x2c] sm:$0xf]
    %v58 = vld [vmem:[%s1 + $0x30] sm:$0xf]
    %v59 = vld [vmem:[%s1 + $0x34] sm:$0xf]
    %v60 = vld [vmem:[%s1 + $0x38] sm:$0xf]
    %v61 = vld [vmem:[%s1 + $0x3c] sm:$0xf]
    %v62 = vld [vmem:[%s4] sm:$0x1]
    %v63 = vlaneseq
    %v64 = vshrl.u32 %v63, 7
    %v65 = vsub.s32 0, %v64
    %v66 = vrot.slane %v62, %v65
    %v83 = vunpack.c.l.b16 %v46
    %v84 = vunpack.c.l.b16 %v47
    %v85 = vunpack.c.l.b16 %v48
    %v86 = vunpack.c.l.b16 %v49
    %v87 = vunpack.c.l.b16 %v50
    %v88 = vunpack.c.l.b16 %v51
    %v89 = vunpack.c.l.b16 %v52
    %v90 = vunpack.c.l.b16 %v53
    %v91 = vunpack.c.l.b16 %v54
    %v92 = vunpack.c.l.b16 %v55
    %v93 = vunpack.c.l.b16 %v56
    %v94 = vunpack.c.l.b16 %v57
    %v95 = vunpack.c.l.b16 %v58
    %v96 = vunpack.c.l.b16 %v59
    %v97 = vunpack.c.l.b16 %v60
    %v98 = vunpack.c.l.b16 %v61
    %v99 = vpack.c.b16 %v84, %v83
    %v100 = vpack.c.b16 %v86, %v85
    %v101 = vpack.c.b16 %v88, %v87
    %v102 = vpack.c.b16 %v90, %v89
    %v103 = vpack.c.b16 %v92, %v91
    %v104 = vpack.c.b16 %v94, %v93
    %v105 = vpack.c.b16 %v96, %v95
    %v106 = vpack.c.b16 %v98, %v97
    %115 = vmatprep.subr.bf16.mxu0 0
    %116 = vmatpush1.bf16.msra.mxu0 %v106
    %117 = vmatprep.subr.bf16.mxu0 0
    %118 = vmatpush1.bf16.msra.mxu0 %v105
    %119 = vmatprep.subr.bf16.mxu0 0
    %120 = vmatpush1.bf16.msra.mxu0 %v104
    %121 = vmatprep.subr.bf16.mxu0 0
    %122 = vmatpush1.bf16.msra.mxu0 %v103
    %123 = vmatprep.subr.bf16.mxu0 0
    %124 = vmatpush1.bf16.msra.mxu0 %v102
    %125 = vmatprep.subr.bf16.mxu0 0
    %126 = vmatpush1.bf16.msra.mxu0 %v101
    %127 = vmatprep.subr.bf16.mxu0 0
    %128 = vmatpush1.bf16.msra.mxu0 %v100
    %129 = vmatprep.subr.bf16.mxu0 0
    %130 = vmatpush1.bf16.msra.mxu0 %v99
    %131 = vmatprep.subr.bf16.mxu0 0
    %132 = vmatpush2.bf16.msra.mxu0 0
    %133 = vmatprep.subr.bf16.mxu0 0
    %134 = vmatpush2.bf16.msra.mxu0 0
    %135 = vmatprep.subr.bf16.mxu0 0
    %136 = vmatpush2.bf16.msra.mxu0 0
    %137 = vmatprep.subr.bf16.mxu0 0
    %138 = vmatpush2.bf16.msra.mxu0 0
    %139 = vmatprep.subr.bf16.mxu0 0
    %140 = vmatpush2.bf16.msra.mxu0 0
    %141 = vmatprep.subr.bf16.mxu0 0
    %142 = vmatpush2.bf16.msra.mxu0 0
    %143 = vmatprep.subr.bf16.mxu0 0
    %144 = vmatpush2.bf16.msra.mxu0 0
    %145 = vmatprep.subr.bf16.mxu0 0
    %146 = vmatpush2.bf16.msra.mxu0 0
    %147 = vmatprep.mubr.bf16.mxu0 0
    %148 = vmatmul.mubr.bf16.gmra.mxu0 %v38
    %v149 = vpop.f32.mrf.mxu0
    %v150 = vadd.f32 %v66, %v149
    %v151 = vpop.f32.mrf.mxu0
    %v152 = vpop.f32.mrf.mxu0
    %v153 = vadd.f32 %v66, %v152
    %v154 = vpop.f32.mrf.mxu0
    %155 = vmatprep.mubr.bf16.mxu0 0
    %156 = vmatmul.mubr.bf16.gmra.mxu0 %v39
    %v157 = vpop.f32.mrf.mxu0
    %v158 = vadd.f32 %v66, %v157
    %v159 = vpop.f32.mrf.mxu0
    %v160 = vpop.f32.mrf.mxu0
    %v161 = vadd.f32 %v66, %v160
    %v162 = vpop.f32.mrf.mxu0
    %163 = vmatprep.mubr.bf16.mxu0 0
    %164 = vmatmul.mubr.bf16.gmra.mxu0 %v40
    %v165 = vpop.f32.mrf.mxu0
    %v166 = vadd.f32 %v66, %v165
    %v167 = vpop.f32.mrf.mxu0
    %v168 = vpop.f32.mrf.mxu0
    %v169 = vadd.f32 %v66, %v168
    %v170 = vpop.f32.mrf.mxu0
    %171 = vmatprep.mubr.bf16.mxu0 0
    %172 = vmatmul.mubr.bf16.gmra.mxu0 %v41
    %v173 = vpop.f32.mrf.mxu0
    %v174 = vadd.f32 %v66, %v173
    %v175 = vpop.f32.mrf.mxu0
    %v176 = vpop.f32.mrf.mxu0
    %v177 = vadd.f32 %v66, %v176
    %v178 = vpop.f32.mrf.mxu0
    %179 = vmatprep.mubr.bf16.mxu0 0
    %180 = vmatmul.mubr.bf16.gmra.mxu0 %v42
    %v181 = vpop.f32.mrf.mxu0
    %v182 = vadd.f32 %v66, %v181
    %v183 = vpop.f32.mrf.mxu0
    %v184 = vpop.f32.mrf.mxu0
    %v185 = vadd.f32 %v66, %v184
    %v186 = vpop.f32.mrf.mxu0
    %187 = vmatprep.mubr.bf16.mxu0 0
    %188 = vmatmul.mubr.bf16.gmra.mxu0 %v43
    %v189 = vpop.f32.mrf.mxu0
    %v190 = vadd.f32 %v66, %v189
    %v191 = vpop.f32.mrf.mxu0
    %v192 = vpop.f32.mrf.mxu0
    %v193 = vadd.f32 %v66, %v192
    %v194 = vpop.f32.mrf.mxu0
    %195 = vmatprep.mubr.bf16.mxu0 0
    %196 = vmatmul.mubr.bf16.gmra.mxu0 %v44
    %v197 = vpop.f32.mrf.mxu0
    %v198 = vadd.f32 %v66, %v197
    %v199 = vpop.f32.mrf.mxu0
    %v200 = vpop.f32.mrf.mxu0
    %v201 = vadd.f32 %v66, %v200
    %v202 = vpop.f32.mrf.mxu0
    %203 = vmatprep.mubr.bf16.mxu0 0
    %204 = vmatmul.mubr.bf16.gmra.mxu0 %v45
    %v205 = vpop.f32.mrf.mxu0
    %v206 = vadd.f32 %v66, %v205
    %v207 = vpop.f32.mrf.mxu0
    %v208 = vpop.f32.mrf.mxu0
    %v209 = vadd.f32 %v66, %v208
    %v210 = vpop.f32.mrf.mxu0
    %211 = vdwg.mxu0
    %v212 = vmax.f32 %v150, 0.0
    %v213 = vmax.f32 %v153, 0.0
    %v214 = vmax.f32 %v158, 0.0
    %v215 = vmax.f32 %v161, 0.0
    %v216 = vmax.f32 %v166, 0.0
    %v217 = vmax.f32 %v169, 0.0
    %v218 = vmax.f32 %v174, 0.0
    %v219 = vmax.f32 %v177, 0.0
    %v220 = vmax.f32 %v182, 0.0
    %v221 = vmax.f32 %v185, 0.0
    %v222 = vmax.f32 %v190, 0.0
    %v223 = vmax.f32 %v193, 0.0
    %v224 = vmax.f32 %v198, 0.0
    %v225 = vmax.f32 %v201, 0.0
    %v226 = vmax.f32 %v206, 0.0
    %v227 = vmax.f32 %v209, 0.0
    %v228 = vlaneseq
    %v229 = vshrl.u32 %v228, 7
    %v230 = vadd.s32 %v229, 8
    %v231 = vadd.s32 %v229, 16
    %v232 = vadd.s32 %v229, 24
    %v233 = vadd.s32 %v229, 32
    %v234 = vadd.s32 %v229, 40
    %v235 = vadd.s32 %v229, 48
    %v236 = vadd.s32 %v229, 56
    %v237 = vadd.s32 %v229, 64
    %v238 = vadd.s32 %v229, 72
    %v239 = vadd.s32 %v229, 80
    %v240 = vadd.s32 %v229, 88
    %v241 = vadd.s32 %v229, 96
    %v242 = vadd.s32 %v229, 104
    %v243 = vadd.s32 %v229, 112
    %v244 = vadd.s32 %v229, 120
    %vm245 = vcmp.lt.s32.totalorder %v229, 0
    %v246 = vsub.s32 0, %v229
    %v247 = vsel %vm245, %v246, %v229
    %v248 = vshrl.u32 %v247, 3
    %v249 = vand.u32 %v247, 7
    %v250 = vsub.s32 0, %v249
    %v251 = vsel %vm245, %v250, %v249
    %vm252 = vcmp.lt.s32.totalorder %v230, 0
    %v253 = vsub.s32 0, %v230
    %v254 = vsel %vm252, %v253, %v230
    %v255 = vshrl.u32 %v254, 3
    %v256 = vand.u32 %v254, 7
    %v257 = vsub.s32 0, %v256
    %v258 = vsel %vm252, %v257, %v256
    %vm259 = vcmp.lt.s32.totalorder %v231, 0
    %v260 = vsub.s32 0, %v231
    %v261 = vsel %vm259, %v260, %v231
    %v262 = vshrl.u32 %v261, 3
    %v263 = vand.u32 %v261, 7
    %v264 = vsub.s32 0, %v263
    %v265 = vsel %vm259, %v264, %v263
    %vm266 = vcmp.lt.s32.totalorder %v232, 0
    %v267 = vsub.s32 0, %v232
    %v268 = vsel %vm266, %v267, %v232
    %v269 = vshrl.u32 %v268, 3
    %v270 = vand.u32 %v268, 7
    %v271 = vsub.s32 0, %v270
    %v272 = vsel %vm266, %v271, %v270
    %vm273 = vcmp.lt.s32.totalorder %v233, 0
    %v274 = vsub.s32 0, %v233
    %v275 = vsel %vm273, %v274, %v233
    %v276 = vshrl.u32 %v275, 3
    %v277 = vand.u32 %v275, 7
    %v278 = vsub.s32 0, %v277
    %v279 = vsel %vm273, %v278, %v277
    %vm280 = vcmp.lt.s32.totalorder %v234, 0
    %v281 = vsub.s32 0, %v234
    %v282 = vsel %vm280, %v281, %v234
    %v283 = vshrl.u32 %v282, 3
    %v284 = vand.u32 %v282, 7
    %v285 = vsub.s32 0, %v284
    %v286 = vsel %vm280, %v285, %v284
    %vm287 = vcmp.lt.s32.totalorder %v235, 0
    %v288 = vsub.s32 0, %v235
    %v289 = vsel %vm287, %v288, %v235
    %v290 = vshrl.u32 %v289, 3
    %v291 = vand.u32 %v289, 7
    %v292 = vsub.s32 0, %v291
    %v293 = vsel %vm287, %v292, %v291
    %vm294 = vcmp.lt.s32.totalorder %v236, 0
    %v295 = vsub.s32 0, %v236
    %v296 = vsel %vm294, %v295, %v236
    %v297 = vshrl.u32 %v296, 3
    %v298 = vand.u32 %v296, 7
    %v299 = vsub.s32 0, %v298
    %v300 = vsel %vm294, %v299, %v298
    %vm301 = vcmp.lt.s32.totalorder %v237, 0
    %v302 = vsub.s32 0, %v237
    %v303 = vsel %vm301, %v302, %v237
    %v304 = vshrl.u32 %v303, 3
    %v305 = vand.u32 %v303, 7
    %v306 = vsub.s32 0, %v305
    %v307 = vsel %vm301, %v306, %v305
    %vm308 = vcmp.lt.s32.totalorder %v238, 0
    %v309 = vsub.s32 0, %v238
    %v310 = vsel %vm308, %v309, %v238
    %v311 = vshrl.u32 %v310, 3
    %v312 = vand.u32 %v310, 7
    %v313 = vsub.s32 0, %v312
    %v314 = vsel %vm308, %v313, %v312
    %vm315 = vcmp.lt.s32.totalorder %v239, 0
    %v316 = vsub.s32 0, %v239
    %v317 = vsel %vm315, %v316, %v239
    %v318 = vshrl.u32 %v317, 3
    %v319 = vand.u32 %v317, 7
    %v320 = vsub.s32 0, %v319
    %v321 = vsel %vm315, %v320, %v319
    %vm322 = vcmp.lt.s32.totalorder %v240, 0
    %v323 = vsub.s32 0, %v240
    %v324 = vsel %vm322, %v323, %v240
    %v325 = vshrl.u32 %v324, 3
    %v326 = vand.u32 %v324, 7
    %v327 = vsub.s32 0, %v326
    %v328 = vsel %vm322, %v327, %v326
    %vm329 = vcmp.lt.s32.totalorder %v241, 0
    %v330 = vsub.s32 0, %v241
    %v331 = vsel %vm329, %v330, %v241
    %v332 = vshrl.u32 %v331, 3
    %v333 = vand.u32 %v331, 7
    %v334 = vsub.s32 0, %v333
    %v335 = vsel %vm329, %v334, %v333
    %vm336 = vcmp.lt.s32.totalorder %v242, 0
    %v337 = vsub.s32 0, %v242
    %v338 = vsel %vm336, %v337, %v242
    %v339 = vshrl.u32 %v338, 3
    %v340 = vand.u32 %v338, 7
    %v341 = vsub.s32 0, %v340
    %v342 = vsel %vm336, %v341, %v340
    %vm343 = vcmp.lt.s32.totalorder %v243, 0
    %v344 = vsub.s32 0, %v243
    %v345 = vsel %vm343, %v344, %v243
    %v346 = vshrl.u32 %v345, 3
    %v347 = vand.u32 %v345, 7
    %v348 = vsub.s32 0, %v347
    %v349 = vsel %vm343, %v348, %v347
    %vm350 = vcmp.lt.s32.totalorder %v244, 0
    %v351 = vsub.s32 0, %v244
    %v352 = vsel %vm350, %v351, %v244
    %v353 = vshrl.u32 %v352, 3
    %v354 = vand.u32 %v352, 7
    %v355 = vsub.s32 0, %v354
    %v356 = vsel %vm350, %v355, %v354
    %vm357 = vcmp.ne.s32.totalorder %v251, 0
    %vm358 = vcmp.ne.s32.totalorder %v258, 0
    %vm359 = vcmp.ne.s32.totalorder %v265, 0
    %vm360 = vcmp.ne.s32.totalorder %v272, 0
    %vm361 = vcmp.ne.s32.totalorder %v279, 0
    %vm362 = vcmp.ne.s32.totalorder %v286, 0
    %vm363 = vcmp.ne.s32.totalorder %v293, 0
    %vm364 = vcmp.ne.s32.totalorder %v300, 0
    %vm365 = vcmp.ne.s32.totalorder %v307, 0
    %vm366 = vcmp.ne.s32.totalorder %v314, 0
    %vm367 = vcmp.ne.s32.totalorder %v321, 0
    %vm368 = vcmp.ne.s32.totalorder %v328, 0
    %vm369 = vcmp.ne.s32.totalorder %v335, 0
    %vm370 = vcmp.ne.s32.totalorder %v342, 0
    %vm371 = vcmp.ne.s32.totalorder %v349, 0
    %vm372 = vcmp.ne.s32.totalorder %v356, 0
    %vm373 = vcmp.lt.s32.totalorder %v251, 0
    %vm374 = vcmp.lt.s32.totalorder %v258, 0
    %vm375 = vcmp.lt.s32.totalorder %v265, 0
    %vm376 = vcmp.lt.s32.totalorder %v272, 0
    %vm377 = vcmp.lt.s32.totalorder %v279, 0
    %vm378 = vcmp.lt.s32.totalorder %v286, 0
    %vm379 = vcmp.lt.s32.totalorder %v293, 0
    %vm380 = vcmp.lt.s32.totalorder %v300, 0
    %vm381 = vcmp.lt.s32.totalorder %v307, 0
    %vm382 = vcmp.lt.s32.totalorder %v314, 0
    %vm383 = vcmp.lt.s32.totalorder %v321, 0
    %vm384 = vcmp.lt.s32.totalorder %v328, 0
    %vm385 = vcmp.lt.s32.totalorder %v335, 0
    %vm386 = vcmp.lt.s32.totalorder %v342, 0
    %vm387 = vcmp.lt.s32.totalorder %v349, 0
    %vm388 = vcmp.lt.s32.totalorder %v356, 0
    %vm389 = vmand %vm373, %vm357
    %vm390 = vmand %vm374, %vm358
    %vm391 = vmand %vm375, %vm359
    %vm392 = vmand %vm376, %vm360
    %vm393 = vmand %vm377, %vm361
    %vm394 = vmand %vm378, %vm362
    %vm395 = vmand %vm379, %vm363
    %vm396 = vmand %vm380, %vm364
    %vm397 = vmand %vm381, %vm365
    %vm398 = vmand %vm382, %vm366
    %vm399 = vmand %vm383, %vm367
    %vm400 = vmand %vm384, %vm368
    %vm401 = vmand %vm385, %vm369
    %vm402 = vmand %vm386, %vm370
    %vm403 = vmand %vm387, %vm371
    %vm404 = vmand %vm388, %vm372
    %v405 = vadd.s32 %v251, 8
    %v406 = vadd.s32 %v258, 8
    %v407 = vadd.s32 %v265, 8
    %v408 = vadd.s32 %v272, 8
    %v409 = vadd.s32 %v279, 8
    %v410 = vadd.s32 %v286, 8
    %v411 = vadd.s32 %v293, 8
    %v412 = vadd.s32 %v300, 8
    %v413 = vadd.s32 %v307, 8
    %v414 = vadd.s32 %v314, 8
    %v415 = vadd.s32 %v321, 8
    %v416 = vadd.s32 %v328, 8
    %v417 = vadd.s32 %v335, 8
    %v418 = vadd.s32 %v342, 8
    %v419 = vadd.s32 %v349, 8
    %v420 = vadd.s32 %v356, 8
    %v421 = vsel %vm389, %v405, %v251
    %v422 = vsel %vm390, %v406, %v258
    %v423 = vsel %vm391, %v407, %v265
    %v424 = vsel %vm392, %v408, %v272
    %v425 = vsel %vm393, %v409, %v279
    %v426 = vsel %vm394, %v410, %v286
    %v427 = vsel %vm395, %v411, %v293
    %v428 = vsel %vm396, %v412, %v300
    %v429 = vsel %vm397, %v413, %v307
    %v430 = vsel %vm398, %v414, %v314
    %v431 = vsel %vm399, %v415, %v321
    %v432 = vsel %vm400, %v416, %v328
    %v433 = vsel %vm401, %v417, %v335
    %v434 = vsel %vm402, %v418, %v342
    %v435 = vsel %vm403, %v419, %v349
    %v436 = vsel %vm404, %v420, %v356
    %vm437 = vcmp.ge.s32.totalorder %v421, 1
    %vm438 = vcmp.ge.s32.totalorder %v422, 1
    %vm439 = vcmp.ge.s32.totalorder %v423, 1
    %vm440 = vcmp.ge.s32.totalorder %v424, 1
    %vm441 = vcmp.ge.s32.totalorder %v425, 1
    %vm442 = vcmp.ge.s32.totalorder %v426, 1
    %vm443 = vcmp.ge.s32.totalorder %v427, 1
    %vm444 = vcmp.ge.s32.totalorder %v428, 1
    %vm445 = vcmp.ge.s32.totalorder %v429, 1
    %vm446 = vcmp.ge.s32.totalorder %v430, 1
    %vm447 = vcmp.ge.s32.totalorder %v431, 1
    %vm448 = vcmp.ge.s32.totalorder %v432, 1
    %vm449 = vcmp.ge.s32.totalorder %v433, 1
    %vm450 = vcmp.ge.s32.totalorder %v434, 1
    %vm451 = vcmp.ge.s32.totalorder %v435, 1
    %vm452 = vcmp.ge.s32.totalorder %v436, 1
    %vm453 = vcmp.lt.s32.totalorder %v421, 7
    %vm454 = vcmp.lt.s32.totalorder %v422, 7
    %vm455 = vcmp.lt.s32.totalorder %v423, 7
    %vm456 = vcmp.lt.s32.totalorder %v424, 7
    %vm457 = vcmp.lt.s32.totalorder %v425, 7
    %vm458 = vcmp.lt.s32.totalorder %v426, 7
    %vm459 = vcmp.lt.s32.totalorder %v427, 7
    %vm460 = vcmp.lt.s32.totalorder %v428, 7
    %vm461 = vcmp.lt.s32.totalorder %v429, 7
    %vm462 = vcmp.lt.s32.totalorder %v430, 7
    %vm463 = vcmp.lt.s32.totalorder %v431, 7
    %vm464 = vcmp.lt.s32.totalorder %v432, 7
    %vm465 = vcmp.lt.s32.totalorder %v433, 7
    %vm466 = vcmp.lt.s32.totalorder %v434, 7
    %vm467 = vcmp.lt.s32.totalorder %v435, 7
    %vm468 = vcmp.lt.s32.totalorder %v436, 7
    %v469 = vrot.slane %v212, 7
    %v470 = vrot.slane %v213, 7
    %v471 = vrot.slane %v214, 7
    %v472 = vrot.slane %v215, 7
    %v473 = vrot.slane %v216, 7
    %v474 = vrot.slane %v217, 7
    %v475 = vrot.slane %v218, 7
    %v476 = vrot.slane %v220, 7
    %v477 = vrot.slane %v221, 7
    %v478 = vrot.slane %v222, 7
    %v479 = vrot.slane %v223, 7
    %v480 = vrot.slane %v224, 7
    %v481 = vrot.slane %v225, 7
    %v482 = vrot.slane %v226, 7
    %vm483 = vcmp.lt.s32.totalorder %v229, 1
    %v484 = vsel %vm483, %v481, %v482
    %v485 = vsel %vm483, %v480, %v481
    %v486 = vsel %vm483, %v479, %v480
    %v487 = vsel %vm483, %v478, %v479
    %v488 = vsel %vm483, %v477, %v478
    %v489 = vsel %vm483, %v476, %v477
    %v490 = vsel %vm483, 0.0, %v476
    %v491 = vsel %vm483, %v475, 0.0
    %v492 = vsel %vm483, %v474, %v475
    %v493 = vsel %vm483, %v473, %v474
    %v494 = vsel %vm483, %v472, %v473
    %v495 = vsel %vm483, %v471, %v472
    %v496 = vsel %vm483, %v470, %v471
    %v497 = vsel %vm483, %v469, %v470
    %v498 = vsel %vm483, 0.0, %v469
    %v499 = vsel %vm483, %v482, 0.0
    %v500 = vsel %vm437, %v499, 0.0
    %v501 = vsel %vm438, %v498, 0.0
    %v502 = vsel %vm439, %v497, 0.0
    %v503 = vsel %vm440, %v496, 0.0
    %v504 = vsel %vm441, %v495, 0.0
    %v505 = vsel %vm442, %v494, 0.0
    %v506 = vsel %vm443, %v493, 0.0
    %v507 = vsel %vm444, %v492, 0.0
    %v508 = vsel %vm445, %v491, 0.0
    %v509 = vsel %vm446, %v490, 0.0
    %v510 = vsel %vm447, %v489, 0.0
    %v511 = vsel %vm448, %v488, 0.0
    %v512 = vsel %vm449, %v487, 0.0
    %v513 = vsel %vm450, %v486, 0.0
    %v514 = vsel %vm451, %v485, 0.0
    %v515 = vsel %vm452, %v484, 0.0
    %v516 = vpack.c.bf16 %v501, %v500
    %v517 = vpack.c.bf16 %v503, %v502
    %v518 = vpack.c.bf16 %v505, %v504
    %v519 = vpack.c.bf16 %v507, %v506
    %v520 = vpack.c.bf16 %v509, %v508
    %v521 = vpack.c.bf16 %v511, %v510
    %v522 = vpack.c.bf16 %v513, %v512
    %v523 = vpack.c.bf16 %v515, %v514
    %v524 = vpack.c.bf16 %v212, 0.0
    %v525 = vpack.c.bf16 %v214, %v213
    %v526 = vpack.c.bf16 %v216, %v215
    %v527 = vpack.c.bf16 %v218, %v217
    %v528 = vpack.c.bf16 %v220, 0.0
    %v529 = vpack.c.bf16 %v222, %v221
    %v530 = vpack.c.bf16 %v224, %v223
    %v531 = vpack.c.bf16 %v226, %v225
    %v532 = vrot.slane %v212, 1
    %v533 = vrot.slane %v213, 1
    %v534 = vrot.slane %v214, 1
    %v535 = vrot.slane %v215, 1
    %v536 = vrot.slane %v216, 1
    %v537 = vrot.slane %v217, 1
    %v538 = vrot.slane %v218, 1
    %v539 = vrot.slane %v220, 1
    %v540 = vrot.slane %v221, 1
    %v541 = vrot.slane %v222, 1
    %v542 = vrot.slane %v223, 1
    %v543 = vrot.slane %v224, 1
    %v544 = vrot.slane %v225, 1
    %v545 = vrot.slane %v226, 1
    %vm546 = vcmp.lt.s32.totalorder %v229, 7
    %v547 = vsel %vm546, %v544, %v545
    %v548 = vsel %vm546, %v543, %v544
    %v549 = vsel %vm546, %v542, %v543
    %v550 = vsel %vm546, %v541, %v542
    %v551 = vsel %vm546, %v540, %v541
    %v552 = vsel %vm546, %v539, %v540
    %v553 = vsel %vm546, 0.0, %v539
    %v554 = vsel %vm546, %v538, 0.0
    %v555 = vsel %vm546, %v537, %v538
    %v556 = vsel %vm546, %v536, %v537
    %v557 = vsel %vm546, %v535, %v536
    %v558 = vsel %vm546, %v534, %v535
    %v559 = vsel %vm546, %v533, %v534
    %v560 = vsel %vm546, %v532, %v533
    %v561 = vsel %vm546, 0.0, %v532
    %v562 = vsel %vm546, %v545, 0.0
    %v563 = vsel %vm453, %v561, 0.0
    %v564 = vsel %vm454, %v560, 0.0
    %v565 = vsel %vm455, %v559, 0.0
    %v566 = vsel %vm456, %v558, 0.0
    %v567 = vsel %vm457, %v557, 0.0
    %v568 = vsel %vm458, %v556, 0.0
    %v569 = vsel %vm459, %v555, 0.0
    %v570 = vsel %vm460, %v554, 0.0
    %v571 = vsel %vm461, %v553, 0.0
    %v572 = vsel %vm462, %v552, 0.0
    %v573 = vsel %vm463, %v551, 0.0
    %v574 = vsel %vm464, %v550, 0.0
    %v575 = vsel %vm465, %v549, 0.0
    %v576 = vsel %vm466, %v548, 0.0
    %v577 = vsel %vm467, %v547, 0.0
    %v578 = vsel %vm468, %v562, 0.0
    %v579 = vpack.c.bf16 %v564, %v563
    %v580 = vpack.c.bf16 %v566, %v565
    %v581 = vpack.c.bf16 %v568, %v567
    %v582 = vpack.c.bf16 %v570, %v569
    %v583 = vpack.c.bf16 %v572, %v571
    %v584 = vpack.c.bf16 %v574, %v573
    %v585 = vpack.c.bf16 %v576, %v575
    %v586 = vpack.c.bf16 %v578, %v577
    %v587 = vrot.slane %v219, 7
    %v588 = vrot.slane %v227, 7
    %v589 = vsel %vm483, %v482, %v588
    %v590 = vsel %vm483, %v587, %v476
    %v591 = vsel %vm483, %v475, %v587
    %v592 = vsel %vm483, %v588, %v469
    %v593 = vsel %vm437, %v592, 0.0
    %v594 = vsel %vm438, %v497, 0.0
    %v595 = vsel %vm439, %v496, 0.0
    %v596 = vsel %vm440, %v495, 0.0
    %v597 = vsel %vm441, %v494, 0.0
    %v598 = vsel %vm442, %v493, 0.0
    %v599 = vsel %vm443, %v492, 0.0
    %v600 = vsel %vm444, %v591, 0.0
    %v601 = vsel %vm445, %v590, 0.0
    %v602 = vsel %vm446, %v489, 0.0
    %v603 = vsel %vm447, %v488, 0.0
    %v604 = vsel %vm448, %v487, 0.0
    %v605 = vsel %vm449, %v486, 0.0
    %v606 = vsel %vm450, %v485, 0.0
    %v607 = vsel %vm451, %v484, 0.0
    %v608 = vsel %vm452, %v589, 0.0
    %v609 = vpack.c.bf16 %v594, %v593
    %v610 = vpack.c.bf16 %v596, %v595
    %v611 = vpack.c.bf16 %v598, %v597
    %v612 = vpack.c.bf16 %v600, %v599
    %v613 = vpack.c.bf16 %v602, %v601
    %v614 = vpack.c.bf16 %v604, %v603
    %v615 = vpack.c.bf16 %v606, %v605
    %v616 = vpack.c.bf16 %v608, %v607
    %v617 = vpack.c.bf16 %v213, %v212
    %v618 = vpack.c.bf16 %v215, %v214
    %v619 = vpack.c.bf16 %v217, %v216
    %v620 = vpack.c.bf16 %v219, %v218
    %v621 = vpack.c.bf16 %v221, %v220
    %v622 = vpack.c.bf16 %v223, %v222
    %v623 = vpack.c.bf16 %v225, %v224
    %v624 = vpack.c.bf16 %v227, %v226
    %v625 = vrot.slane %v219, 1
    %v626 = vrot.slane %v227, 1
    %v627 = vsel %vm546, %v545, %v626
    %v628 = vsel %vm546, %v625, %v539
    %v629 = vsel %vm546, %v538, %v625
    %v630 = vsel %vm546, %v626, %v532
    %v631 = vsel %vm453, %v560, 0.0
    %v632 = vsel %vm454, %v559, 0.0
    %v633 = vsel %vm455, %v558, 0.0
    %v634 = vsel %vm456, %v557, 0.0
    %v635 = vsel %vm457, %v556, 0.0
    %v636 = vsel %vm458, %v555, 0.0
    %v637 = vsel %vm459, %v629, 0.0
    %v638 = vsel %vm460, %v628, 0.0
    %v639 = vsel %vm461, %v552, 0.0
    %v640 = vsel %vm462, %v551, 0.0
    %v641 = vsel %vm463, %v550, 0.0
    %v642 = vsel %vm464, %v549, 0.0
    %v643 = vsel %vm465, %v548, 0.0
    %v644 = vsel %vm466, %v547, 0.0
    %v645 = vsel %vm467, %v627, 0.0
    %v646 = vsel %vm468, %v630, 0.0
    %v647 = vpack.c.bf16 %v632, %v631
    %v648 = vpack.c.bf16 %v634, %v633
    %v649 = vpack.c.bf16 %v636, %v635
    %v650 = vpack.c.bf16 %v638, %v637
    %v651 = vpack.c.bf16 %v640, %v639
    %v652 = vpack.c.bf16 %v642, %v641
    %v653 = vpack.c.bf16 %v644, %v643
    %v654 = vpack.c.bf16 %v646, %v645
    %v655 = vsel %vm483, %v588, 0.0
    %v656 = vsel %vm483, 0.0, %v477
    %v657 = vsel %vm483, %v587, 0.0
    %v658 = vsel %vm483, 0.0, %v470
    %v659 = vsel %vm437, %v658, 0.0
    %v660 = vsel %vm438, %v496, 0.0
    %v661 = vsel %vm439, %v495, 0.0
    %v662 = vsel %vm440, %v494, 0.0
    %v663 = vsel %vm441, %v493, 0.0
    %v664 = vsel %vm442, %v492, 0.0
    %v665 = vsel %vm443, %v591, 0.0
    %v666 = vsel %vm444, %v657, 0.0
    %v667 = vsel %vm445, %v656, 0.0
    %v668 = vsel %vm446, %v488, 0.0
    %v669 = vsel %vm447, %v487, 0.0
    %v670 = vsel %vm448, %v486, 0.0
    %v671 = vsel %vm449, %v485, 0.0
    %v672 = vsel %vm450, %v484, 0.0
    %v673 = vsel %vm451, %v589, 0.0
    %v674 = vsel %vm452, %v655, 0.0
    %v675 = vpack.c.bf16 %v660, %v659
    %v676 = vpack.c.bf16 %v662, %v661
    %v677 = vpack.c.bf16 %v664, %v663
    %v678 = vpack.c.bf16 %v666, %v665
    %v679 = vpack.c.bf16 %v668, %v667
    %v680 = vpack.c.bf16 %v670, %v669
    %v681 = vpack.c.bf16 %v672, %v671
    %v682 = vpack.c.bf16 %v674, %v673
    %v683 = vpack.c.bf16 0.0, %v219
    %v684 = vpack.c.bf16 0.0, %v227
    %v685 = vsel %vm546, %v626, 0.0
    %v686 = vsel %vm546, 0.0, %v540
    %v687 = vsel %vm546, %v625, 0.0
    %v688 = vsel %vm546, 0.0, %v533
    %v689 = vsel %vm453, %v559, 0.0
    %v690 = vsel %vm454, %v558, 0.0
    %v691 = vsel %vm455, %v557, 0.0
    %v692 = vsel %vm456, %v556, 0.0
    %v693 = vsel %vm457, %v555, 0.0
    %v694 = vsel %vm458, %v629, 0.0
    %v695 = vsel %vm459, %v687, 0.0
    %v696 = vsel %vm460, %v686, 0.0
    %v697 = vsel %vm461, %v551, 0.0
    %v698 = vsel %vm462, %v550, 0.0
    %v699 = vsel %vm463, %v549, 0.0
    %v700 = vsel %vm464, %v548, 0.0
    %v701 = vsel %vm465, %v547, 0.0
    %v702 = vsel %vm466, %v627, 0.0
    %v703 = vsel %vm467, %v685, 0.0
    %v704 = vsel %vm468, %v688, 0.0
    %v705 = vpack.c.bf16 %v690, %v689
    %v706 = vpack.c.bf16 %v692, %v691
    %v707 = vpack.c.bf16 %v694, %v693
    %v708 = vpack.c.bf16 %v696, %v695
    %v709 = vpack.c.bf16 %v698, %v697
    %v710 = vpack.c.bf16 %v700, %v699
    %v711 = vpack.c.bf16 %v702, %v701
    %v712 = vpack.c.bf16 %v704, %v703
    %v713 = vld [vmem:[%s2] sm:$0xf]
    %v714 = vld [vmem:[%s2 + $0x4] sm:$0xf]
    %v715 = vld [vmem:[%s2 + $0x8] sm:$0xf]
    %v716 = vld [vmem:[%s2 + $0xc] sm:$0xf]
    %v717 = vld [vmem:[%s2 + $0x10] sm:$0xf]
    %v718 = vld [vmem:[%s2 + $0x14] sm:$0xf]
    %v719 = vld [vmem:[%s2 + $0x18] sm:$0xf]
    %v720 = vld [vmem:[%s2 + $0x1c] sm:$0xf]
    %v721 = vld [vmem:[%s2 + $0x20] sm:$0xf]
    %v722 = vld [vmem:[%s2 + $0x24] sm:$0xf]
    %v723 = vld [vmem:[%s2 + $0x28] sm:$0xf]
    %v724 = vld [vmem:[%s2 + $0x2c] sm:$0xf]
    %v725 = vld [vmem:[%s2 + $0x30] sm:$0xf]
    %v726 = vld [vmem:[%s2 + $0x34] sm:$0xf]
    %v727 = vld [vmem:[%s2 + $0x38] sm:$0xf]
    %v728 = vld [vmem:[%s2 + $0x3c] sm:$0xf]
    %v729 = vld [vmem:[%s2 + $0x40] sm:$0xf]
    %v730 = vld [vmem:[%s2 + $0x44] sm:$0xf]
    %v731 = vld [vmem:[%s2 + $0x48] sm:$0xf]
    %v732 = vld [vmem:[%s2 + $0x4c] sm:$0xf]
    %v733 = vld [vmem:[%s2 + $0x50] sm:$0xf]
    %v734 = vld [vmem:[%s2 + $0x54] sm:$0xf]
    %v735 = vld [vmem:[%s2 + $0x58] sm:$0xf]
    %v736 = vld [vmem:[%s2 + $0x5c] sm:$0xf]
    %v737 = vld [vmem:[%s2 + $0x60] sm:$0xf]
    %v738 = vld [vmem:[%s2 + $0x64] sm:$0xf]
    %v739 = vld [vmem:[%s2 + $0x68] sm:$0xf]
    %v740 = vld [vmem:[%s2 + $0x6c] sm:$0xf]
    %v741 = vld [vmem:[%s2 + $0x70] sm:$0xf]
    %v742 = vld [vmem:[%s2 + $0x74] sm:$0xf]
    %v743 = vld [vmem:[%s2 + $0x78] sm:$0xf]
    %v744 = vld [vmem:[%s2 + $0x7c] sm:$0xf]
    %v745 = vld [vmem:[%s2 + $0x80] sm:$0xf]
    %v746 = vld [vmem:[%s2 + $0x84] sm:$0xf]
    %v747 = vld [vmem:[%s2 + $0x88] sm:$0xf]
    %v748 = vld [vmem:[%s2 + $0x8c] sm:$0xf]
    %v749 = vld [vmem:[%s2 + $0x90] sm:$0xf]
    %v750 = vld [vmem:[%s2 + $0x94] sm:$0xf]
    %v751 = vld [vmem:[%s2 + $0x98] sm:$0xf]
    %v752 = vld [vmem:[%s2 + $0x9c] sm:$0xf]
    %v753 = vld [vmem:[%s2 + $0xa0] sm:$0xf]
    %v754 = vld [vmem:[%s2 + $0xa4] sm:$0xf]
    %v755 = vld [vmem:[%s2 + $0xa8] sm:$0xf]
    %v756 = vld [vmem:[%s2 + $0xac] sm:$0xf]
    %v757 = vld [vmem:[%s2 + $0xb0] sm:$0xf]
    %v758 = vld [vmem:[%s2 + $0xb4] sm:$0xf]
    %v759 = vld [vmem:[%s2 + $0xb8] sm:$0xf]
    %v760 = vld [vmem:[%s2 + $0xbc] sm:$0xf]
    %v761 = vld [vmem:[%s2 + $0xc0] sm:$0xf]
    %v762 = vld [vmem:[%s2 + $0xc4] sm:$0xf]
    %v763 = vld [vmem:[%s2 + $0xc8] sm:$0xf]
    %v764 = vld [vmem:[%s2 + $0xcc] sm:$0xf]
    %v765 = vld [vmem:[%s2 + $0xd0] sm:$0xf]
    %v766 = vld [vmem:[%s2 + $0xd4] sm:$0xf]
    %v767 = vld [vmem:[%s2 + $0xd8] sm:$0xf]
    %v768 = vld [vmem:[%s2 + $0xdc] sm:$0xf]
    %v769 = vld [vmem:[%s2 + $0xe0] sm:$0xf]
    %v770 = vld [vmem:[%s2 + $0xe4] sm:$0xf]
    %v771 = vld [vmem:[%s2 + $0xe8] sm:$0xf]
    %v772 = vld [vmem:[%s2 + $0xec] sm:$0xf]
    %v773 = vld [vmem:[%s2 + $0xf0] sm:$0xf]
    %v774 = vld [vmem:[%s2 + $0xf4] sm:$0xf]
    %v775 = vld [vmem:[%s2 + $0xf8] sm:$0xf]
    %v776 = vld [vmem:[%s2 + $0xfc] sm:$0xf]
    %v777 = vld [vmem:[%s2 + $0x100] sm:$0xf]
    %v778 = vld [vmem:[%s2 + $0x104] sm:$0xf]
    %v779 = vld [vmem:[%s2 + $0x108] sm:$0xf]
    %v780 = vld [vmem:[%s2 + $0x10c] sm:$0xf]
    %v781 = vld [vmem:[%s2 + $0x110] sm:$0xf]
    %v782 = vld [vmem:[%s2 + $0x114] sm:$0xf]
    %v783 = vld [vmem:[%s2 + $0x118] sm:$0xf]
    %v784 = vld [vmem:[%s2 + $0x11c] sm:$0xf]
    %v785 = vld [vmem:[%s2 + $0x120] sm:$0xf]
    %v786 = vld [vmem:[%s2 + $0x124] sm:$0xf]
    %v787 = vld [vmem:[%s2 + $0x128] sm:$0xf]
    %v788 = vld [vmem:[%s2 + $0x12c] sm:$0xf]
    %v789 = vld [vmem:[%s2 + $0x130] sm:$0xf]
    %v790 = vld [vmem:[%s2 + $0x134] sm:$0xf]
    %v791 = vld [vmem:[%s2 + $0x138] sm:$0xf]
    %v792 = vld [vmem:[%s2 + $0x13c] sm:$0xf]
    %v793 = vld [vmem:[%s2 + $0x140] sm:$0xf]
    %v794 = vld [vmem:[%s2 + $0x144] sm:$0xf]
    %v795 = vld [vmem:[%s2 + $0x148] sm:$0xf]
    %v796 = vld [vmem:[%s2 + $0x14c] sm:$0xf]
    %v797 = vld [vmem:[%s2 + $0x150] sm:$0xf]
    %v798 = vld [vmem:[%s2 + $0x154] sm:$0xf]
    %v799 = vld [vmem:[%s2 + $0x158] sm:$0xf]
    %v800 = vld [vmem:[%s2 + $0x15c] sm:$0xf]
    %v801 = vld [vmem:[%s2 + $0x160] sm:$0xf]
    %v802 = vld [vmem:[%s2 + $0x164] sm:$0xf]
    %v803 = vld [vmem:[%s2 + $0x168] sm:$0xf]
    %v804 = vld [vmem:[%s2 + $0x16c] sm:$0xf]
    %v805 = vld [vmem:[%s2 + $0x170] sm:$0xf]
    %v806 = vld [vmem:[%s2 + $0x174] sm:$0xf]
    %v807 = vld [vmem:[%s2 + $0x178] sm:$0xf]
    %v808 = vld [vmem:[%s2 + $0x17c] sm:$0xf]
    %v809 = vld [vmem:[%s2 + $0x180] sm:$0xf]
    %v810 = vld [vmem:[%s2 + $0x184] sm:$0xf]
    %v811 = vld [vmem:[%s2 + $0x188] sm:$0xf]
    %v812 = vld [vmem:[%s2 + $0x18c] sm:$0xf]
    %v813 = vld [vmem:[%s2 + $0x190] sm:$0xf]
    %v814 = vld [vmem:[%s2 + $0x194] sm:$0xf]
    %v815 = vld [vmem:[%s2 + $0x198] sm:$0xf]
    %v816 = vld [vmem:[%s2 + $0x19c] sm:$0xf]
    %v817 = vld [vmem:[%s2 + $0x1a0] sm:$0xf]
    %v818 = vld [vmem:[%s2 + $0x1a4] sm:$0xf]
    %v819 = vld [vmem:[%s2 + $0x1a8] sm:$0xf]
    %v820 = vld [vmem:[%s2 + $0x1ac] sm:$0xf]
    %v821 = vld [vmem:[%s2 + $0x1b0] sm:$0xf]
    %v822 = vld [vmem:[%s2 + $0x1b4] sm:$0xf]
    %v823 = vld [vmem:[%s2 + $0x1b8] sm:$0xf]
    %v824 = vld [vmem:[%s2 + $0x1bc] sm:$0xf]
    %v825 = vld [vmem:[%s2 + $0x1c0] sm:$0xf]
    %v826 = vld [vmem:[%s2 + $0x1c4] sm:$0xf]
    %v827 = vld [vmem:[%s2 + $0x1c8] sm:$0xf]
    %v828 = vld [vmem:[%s2 + $0x1cc] sm:$0xf]
    %v829 = vld [vmem:[%s2 + $0x1d0] sm:$0xf]
    %v830 = vld [vmem:[%s2 + $0x1d4] sm:$0xf]
    %v831 = vld [vmem:[%s2 + $0x1d8] sm:$0xf]
    %v832 = vld [vmem:[%s2 + $0x1dc] sm:$0xf]
    %v833 = vld [vmem:[%s2 + $0x1e0] sm:$0xf]
    %v834 = vld [vmem:[%s2 + $0x1e4] sm:$0xf]
    %v835 = vld [vmem:[%s2 + $0x1e8] sm:$0xf]
    %v836 = vld [vmem:[%s2 + $0x1ec] sm:$0xf]
    %v837 = vld [vmem:[%s2 + $0x1f0] sm:$0xf]
    %v838 = vld [vmem:[%s2 + $0x1f4] sm:$0xf]
    %v839 = vld [vmem:[%s2 + $0x1f8] sm:$0xf]
    %v840 = vld [vmem:[%s2 + $0x1fc] sm:$0xf]
    %v841 = vld [vmem:[%s2 + $0x200] sm:$0xf]
    %v842 = vld [vmem:[%s2 + $0x204] sm:$0xf]
    %v843 = vld [vmem:[%s2 + $0x208] sm:$0xf]
    %v844 = vld [vmem:[%s2 + $0x20c] sm:$0xf]
    %v845 = vld [vmem:[%s2 + $0x210] sm:$0xf]
    %v846 = vld [vmem:[%s2 + $0x214] sm:$0xf]
    %v847 = vld [vmem:[%s2 + $0x218] sm:$0xf]
    %v848 = vld [vmem:[%s2 + $0x21c] sm:$0xf]
    %v849 = vld [vmem:[%s2 + $0x220] sm:$0xf]
    %v850 = vld [vmem:[%s2 + $0x224] sm:$0xf]
    %v851 = vld [vmem:[%s2 + $0x228] sm:$0xf]
    %v852 = vld [vmem:[%s2 + $0x22c] sm:$0xf]
    %v853 = vld [vmem:[%s2 + $0x230] sm:$0xf]
    %v854 = vld [vmem:[%s2 + $0x234] sm:$0xf]
    %v855 = vld [vmem:[%s2 + $0x238] sm:$0xf]
    %v856 = vld [vmem:[%s2 + $0x23c] sm:$0xf]
    %v857 = vld [vmem:[%s4 + $0x1] sm:$0x1]
    %v858 = vlaneseq
    %v859 = vshrl.u32 %v858, 7
    %v860 = vsub.s32 0, %v859
    %v861 = vrot.slane %v857, %v860
    %v1006 = vunpack.c.l.b16 %v713
    %v1007 = vunpack.c.l.b16 %v714
    %v1008 = vunpack.c.l.b16 %v715
    %v1009 = vunpack.c.l.b16 %v716
    %v1010 = vunpack.c.l.b16 %v717
    %v1011 = vunpack.c.l.b16 %v718
    %v1012 = vunpack.c.l.b16 %v719
    %v1013 = vunpack.c.l.b16 %v720
    %v1014 = vunpack.c.l.b16 %v721
    %v1015 = vunpack.c.l.b16 %v722
    %v1016 = vunpack.c.l.b16 %v723
    %v1017 = vunpack.c.l.b16 %v724
    %v1018 = vunpack.c.l.b16 %v725
    %v1019 = vunpack.c.l.b16 %v726
    %v1020 = vunpack.c.l.b16 %v727
    %v1021 = vunpack.c.l.b16 %v728
    %v1022 = vunpack.c.l.b16 %v729
    %v1023 = vunpack.c.l.b16 %v730
    %v1024 = vunpack.c.l.b16 %v731
    %v1025 = vunpack.c.l.b16 %v732
    %v1026 = vunpack.c.l.b16 %v733
    %v1027 = vunpack.c.l.b16 %v734
    %v1028 = vunpack.c.l.b16 %v735
    %v1029 = vunpack.c.l.b16 %v736
    %v1030 = vunpack.c.l.b16 %v737
    %v1031 = vunpack.c.l.b16 %v738
    %v1032 = vunpack.c.l.b16 %v739
    %v1033 = vunpack.c.l.b16 %v740
    %v1034 = vunpack.c.l.b16 %v741
    %v1035 = vunpack.c.l.b16 %v742
    %v1036 = vunpack.c.l.b16 %v743
    %v1037 = vunpack.c.l.b16 %v744
    %v1038 = vunpack.c.l.b16 %v745
    %v1039 = vunpack.c.l.b16 %v746
    %v1040 = vunpack.c.l.b16 %v747
    %v1041 = vunpack.c.l.b16 %v748
    %v1042 = vunpack.c.l.b16 %v749
    %v1043 = vunpack.c.l.b16 %v750
    %v1044 = vunpack.c.l.b16 %v751
    %v1045 = vunpack.c.l.b16 %v752
    %v1046 = vunpack.c.l.b16 %v753
    %v1047 = vunpack.c.l.b16 %v754
    %v1048 = vunpack.c.l.b16 %v755
    %v1049 = vunpack.c.l.b16 %v756
    %v1050 = vunpack.c.l.b16 %v757
    %v1051 = vunpack.c.l.b16 %v758
    %v1052 = vunpack.c.l.b16 %v759
    %v1053 = vunpack.c.l.b16 %v760
    %v1054 = vunpack.c.l.b16 %v761
    %v1055 = vunpack.c.l.b16 %v762
    %v1056 = vunpack.c.l.b16 %v763
    %v1057 = vunpack.c.l.b16 %v764
    %v1058 = vunpack.c.l.b16 %v765
    %v1059 = vunpack.c.l.b16 %v766
    %v1060 = vunpack.c.l.b16 %v767
    %v1061 = vunpack.c.l.b16 %v768
    %v1062 = vunpack.c.l.b16 %v769
    %v1063 = vunpack.c.l.b16 %v770
    %v1064 = vunpack.c.l.b16 %v771
    %v1065 = vunpack.c.l.b16 %v772
    %v1066 = vunpack.c.l.b16 %v773
    %v1067 = vunpack.c.l.b16 %v774
    %v1068 = vunpack.c.l.b16 %v775
    %v1069 = vunpack.c.l.b16 %v776
    %v1070 = vunpack.c.l.b16 %v777
    %v1071 = vunpack.c.l.b16 %v778
    %v1072 = vunpack.c.l.b16 %v779
    %v1073 = vunpack.c.l.b16 %v780
    %v1074 = vunpack.c.l.b16 %v781
    %v1075 = vunpack.c.l.b16 %v782
    %v1076 = vunpack.c.l.b16 %v783
    %v1077 = vunpack.c.l.b16 %v784
    %v1078 = vunpack.c.l.b16 %v785
    %v1079 = vunpack.c.l.b16 %v786
    %v1080 = vunpack.c.l.b16 %v787
    %v1081 = vunpack.c.l.b16 %v788
    %v1082 = vunpack.c.l.b16 %v789
    %v1083 = vunpack.c.l.b16 %v790
    %v1084 = vunpack.c.l.b16 %v791
    %v1085 = vunpack.c.l.b16 %v792
    %v1086 = vunpack.c.l.b16 %v793
    %v1087 = vunpack.c.l.b16 %v794
    %v1088 = vunpack.c.l.b16 %v795
    %v1089 = vunpack.c.l.b16 %v796
    %v1090 = vunpack.c.l.b16 %v797
    %v1091 = vunpack.c.l.b16 %v798
    %v1092 = vunpack.c.l.b16 %v799
    %v1093 = vunpack.c.l.b16 %v800
    %v1094 = vunpack.c.l.b16 %v801
    %v1095 = vunpack.c.l.b16 %v802
    %v1096 = vunpack.c.l.b16 %v803
    %v1097 = vunpack.c.l.b16 %v804
    %v1098 = vunpack.c.l.b16 %v805
    %v1099 = vunpack.c.l.b16 %v806
    %v1100 = vunpack.c.l.b16 %v807
    %v1101 = vunpack.c.l.b16 %v808
    %v1102 = vunpack.c.l.b16 %v809
    %v1103 = vunpack.c.l.b16 %v810
    %v1104 = vunpack.c.l.b16 %v811
    %v1105 = vunpack.c.l.b16 %v812
    %v1106 = vunpack.c.l.b16 %v813
    %v1107 = vunpack.c.l.b16 %v814
    %v1108 = vunpack.c.l.b16 %v815
    %v1109 = vunpack.c.l.b16 %v816
    %v1110 = vunpack.c.l.b16 %v817
    %v1111 = vunpack.c.l.b16 %v818
    %v1112 = vunpack.c.l.b16 %v819
    %v1113 = vunpack.c.l.b16 %v820
    %v1114 = vunpack.c.l.b16 %v821
    %v1115 = vunpack.c.l.b16 %v822
    %v1116 = vunpack.c.l.b16 %v823
    %v1117 = vunpack.c.l.b16 %v824
    %v1118 = vunpack.c.l.b16 %v825
    %v1119 = vunpack.c.l.b16 %v826
    %v1120 = vunpack.c.l.b16 %v827
    %v1121 = vunpack.c.l.b16 %v828
    %v1122 = vunpack.c.l.b16 %v829
    %v1123 = vunpack.c.l.b16 %v830
    %v1124 = vunpack.c.l.b16 %v831
    %v1125 = vunpack.c.l.b16 %v832
    %v1126 = vunpack.c.l.b16 %v833
    %v1127 = vunpack.c.l.b16 %v834
    %v1128 = vunpack.c.l.b16 %v835
    %v1129 = vunpack.c.l.b16 %v836
    %v1130 = vunpack.c.l.b16 %v837
    %v1131 = vunpack.c.l.b16 %v838
    %v1132 = vunpack.c.l.b16 %v839
    %v1133 = vunpack.c.l.b16 %v840
    %v1134 = vunpack.c.l.b16 %v841
    %v1135 = vunpack.c.l.b16 %v842
    %v1136 = vunpack.c.l.b16 %v843
    %v1137 = vunpack.c.l.b16 %v844
    %v1138 = vunpack.c.l.b16 %v845
    %v1139 = vunpack.c.l.b16 %v846
    %v1140 = vunpack.c.l.b16 %v847
    %v1141 = vunpack.c.l.b16 %v848
    %v1142 = vunpack.c.l.b16 %v849
    %v1143 = vunpack.c.l.b16 %v850
    %v1144 = vunpack.c.l.b16 %v851
    %v1145 = vunpack.c.l.b16 %v852
    %v1146 = vunpack.c.l.b16 %v853
    %v1147 = vunpack.c.l.b16 %v854
    %v1148 = vunpack.c.l.b16 %v855
    %v1149 = vunpack.c.l.b16 %v856
    %v1150 = vpack.c.b16 %v1007, %v1006
    %v1151 = vpack.c.b16 %v1009, %v1008
    %v1152 = vpack.c.b16 %v1011, %v1010
    %v1153 = vpack.c.b16 %v1013, %v1012
    %v1154 = vpack.c.b16 %v1015, %v1014
    %v1155 = vpack.c.b16 %v1017, %v1016
    %v1156 = vpack.c.b16 %v1019, %v1018
    %v1157 = vpack.c.b16 %v1021, %v1020
    %v1158 = vpack.c.b16 %v1023, %v1022
    %v1159 = vpack.c.b16 %v1025, %v1024
    %v1160 = vpack.c.b16 %v1027, %v1026
    %v1161 = vpack.c.b16 %v1029, %v1028
    %v1162 = vpack.c.b16 %v1031, %v1030
    %v1163 = vpack.c.b16 %v1033, %v1032
    %v1164 = vpack.c.b16 %v1035, %v1034
    %v1165 = vpack.c.b16 %v1037, %v1036
    %v1166 = vpack.c.b16 %v1039, %v1038
    %v1167 = vpack.c.b16 %v1041, %v1040
    %v1168 = vpack.c.b16 %v1043, %v1042
    %v1169 = vpack.c.b16 %v1045, %v1044
    %v1170 = vpack.c.b16 %v1047, %v1046
    %v1171 = vpack.c.b16 %v1049, %v1048
    %v1172 = vpack.c.b16 %v1051, %v1050
    %v1173 = vpack.c.b16 %v1053, %v1052
    %v1174 = vpack.c.b16 %v1055, %v1054
    %v1175 = vpack.c.b16 %v1057, %v1056
    %v1176 = vpack.c.b16 %v1059, %v1058
    %v1177 = vpack.c.b16 %v1061, %v1060
    %v1178 = vpack.c.b16 %v1063, %v1062
    %v1179 = vpack.c.b16 %v1065, %v1064
    %v1180 = vpack.c.b16 %v1067, %v1066
    %v1181 = vpack.c.b16 %v1069, %v1068
    %v1182 = vpack.c.b16 %v1071, %v1070
    %v1183 = vpack.c.b16 %v1073, %v1072
    %v1184 = vpack.c.b16 %v1075, %v1074
    %v1185 = vpack.c.b16 %v1077, %v1076
    %v1186 = vpack.c.b16 %v1079, %v1078
    %v1187 = vpack.c.b16 %v1081, %v1080
    %v1188 = vpack.c.b16 %v1083, %v1082
    %v1189 = vpack.c.b16 %v1085, %v1084
    %v1190 = vpack.c.b16 %v1087, %v1086
    %v1191 = vpack.c.b16 %v1089, %v1088
    %v1192 = vpack.c.b16 %v1091, %v1090
    %v1193 = vpack.c.b16 %v1093, %v1092
    %v1194 = vpack.c.b16 %v1095, %v1094
    %v1195 = vpack.c.b16 %v1097, %v1096
    %v1196 = vpack.c.b16 %v1099, %v1098
    %v1197 = vpack.c.b16 %v1101, %v1100
    %v1198 = vpack.c.b16 %v1103, %v1102
    %v1199 = vpack.c.b16 %v1105, %v1104
    %v1200 = vpack.c.b16 %v1107, %v1106
    %v1201 = vpack.c.b16 %v1109, %v1108
    %v1202 = vpack.c.b16 %v1111, %v1110
    %v1203 = vpack.c.b16 %v1113, %v1112
    %v1204 = vpack.c.b16 %v1115, %v1114
    %v1205 = vpack.c.b16 %v1117, %v1116
    %v1206 = vpack.c.b16 %v1119, %v1118
    %v1207 = vpack.c.b16 %v1121, %v1120
    %v1208 = vpack.c.b16 %v1123, %v1122
    %v1209 = vpack.c.b16 %v1125, %v1124
    %v1210 = vpack.c.b16 %v1127, %v1126
    %v1211 = vpack.c.b16 %v1129, %v1128
    %v1212 = vpack.c.b16 %v1131, %v1130
    %v1213 = vpack.c.b16 %v1133, %v1132
    %v1214 = vpack.c.b16 %v1135, %v1134
    %v1215 = vpack.c.b16 %v1137, %v1136
    %v1216 = vpack.c.b16 %v1139, %v1138
    %v1217 = vpack.c.b16 %v1141, %v1140
    %v1218 = vpack.c.b16 %v1143, %v1142
    %v1219 = vpack.c.b16 %v1145, %v1144
    %v1220 = vpack.c.b16 %v1147, %v1146
    %v1221 = vpack.c.b16 %v1149, %v1148
    %1294 = vmatprep.subr.bf16.mxu0 0
    %1295 = vmatpush1.bf16.msra.mxu0 %v1157
    %1296 = vmatprep.subr.bf16.mxu0 0
    %1297 = vmatpush1.bf16.msra.mxu0 %v1156
    %1298 = vmatprep.subr.bf16.mxu0 0
    %1299 = vmatpush1.bf16.msra.mxu0 %v1155
    %1300 = vmatprep.subr.bf16.mxu0 0
    %1301 = vmatpush1.bf16.msra.mxu0 %v1154
    %1302 = vmatprep.subr.bf16.mxu0 0
    %1303 = vmatpush1.bf16.msra.mxu0 %v1153
    %1304 = vmatprep.subr.bf16.mxu0 0
    %1305 = vmatpush1.bf16.msra.mxu0 %v1152
    %1306 = vmatprep.subr.bf16.mxu0 0
    %1307 = vmatpush1.bf16.msra.mxu0 %v1151
    %1308 = vmatprep.subr.bf16.mxu0 0
    %1309 = vmatpush1.bf16.msra.mxu0 %v1150
    %1310 = vmatprep.subr.bf16.mxu0 0
    %1311 = vmatpush2.bf16.msra.mxu0 %v1165
    %1312 = vmatprep.subr.bf16.mxu0 0
    %1313 = vmatpush2.bf16.msra.mxu0 %v1164
    %1314 = vmatprep.subr.bf16.mxu0 0
    %1315 = vmatpush2.bf16.msra.mxu0 %v1163
    %1316 = vmatprep.subr.bf16.mxu0 0
    %1317 = vmatpush2.bf16.msra.mxu0 %v1162
    %1318 = vmatprep.subr.bf16.mxu0 0
    %1319 = vmatpush2.bf16.msra.mxu0 %v1161
    %1320 = vmatprep.subr.bf16.mxu0 0
    %1321 = vmatpush2.bf16.msra.mxu0 %v1160
    %1322 = vmatprep.subr.bf16.mxu0 0
    %1323 = vmatpush2.bf16.msra.mxu0 %v1159
    %1324 = vmatprep.subr.bf16.mxu0 0
    %1325 = vmatpush2.bf16.msra.mxu0 %v1158
    %1326 = vmatprep.mubr.bf16.mxu0 %v524
    %1327 = vmatmul.mubr.bf16.gmra.mxu0 %v516
    %v1328 = vpop.f32.mrf.mxu0
    %v1329 = vadd.f32 %v861, %v1328
    %v1330 = vpop.f32.mrf.mxu0
    %v1331 = vpop.f32.mrf.mxu0
    %v1332 = vadd.f32 %v861, %v1331
    %v1333 = vpop.f32.mrf.mxu0
    %1334 = vmatprep.mubr.bf16.mxu0 %v525
    %1335 = vmatmul.mubr.bf16.gmra.mxu0 %v517
    %v1336 = vpop.f32.mrf.mxu0
    %v1337 = vadd.f32 %v861, %v1336
    %v1338 = vpop.f32.mrf.mxu0
    %v1339 = vpop.f32.mrf.mxu0
    %v1340 = vadd.f32 %v861, %v1339
    %v1341 = vpop.f32.mrf.mxu0
    %1342 = vmatprep.mubr.bf16.mxu0 %v526
    %1343 = vmatmul.mubr.bf16.gmra.mxu0 %v518
    %v1344 = vpop.f32.mrf.mxu0
    %v1345 = vadd.f32 %v861, %v1344
    %v1346 = vpop.f32.mrf.mxu0
    %v1347 = vpop.f32.mrf.mxu0
    %v1348 = vadd.f32 %v861, %v1347
    %v1349 = vpop.f32.mrf.mxu0
    %1350 = vmatprep.mubr.bf16.mxu0 %v527
    %1351 = vmatmul.mubr.bf16.gmra.mxu0 %v519
    %v1352 = vpop.f32.mrf.mxu0
    %v1353 = vadd.f32 %v861, %v1352
    %v1354 = vpop.f32.mrf.mxu0
    %v1355 = vpop.f32.mrf.mxu0
    %v1356 = vadd.f32 %v861, %v1355
    %v1357 = vpop.f32.mrf.mxu0
    %1358 = vmatprep.mubr.bf16.mxu0 %v528
    %1359 = vmatmul.mubr.bf16.gmra.mxu0 %v520
    %v1360 = vpop.f32.mrf.mxu0
    %v1361 = vadd.f32 %v861, %v1360
    %v1362 = vpop.f32.mrf.mxu0
    %v1363 = vpop.f32.mrf.mxu0
    %v1364 = vadd.f32 %v861, %v1363
    %v1365 = vpop.f32.mrf.mxu0
    %1366 = vmatprep.mubr.bf16.mxu0 %v529
    %1367 = vmatmul.mubr.bf16.gmra.mxu0 %v521
    %v1368 = vpop.f32.mrf.mxu0
    %v1369 = vadd.f32 %v861, %v1368
    %v1370 = vpop.f32.mrf.mxu0
    %v1371 = vpop.f32.mrf.mxu0
    %v1372 = vadd.f32 %v861, %v1371
    %v1373 = vpop.f32.mrf.mxu0
    %1374 = vmatprep.mubr.bf16.mxu0 %v530
    %1375 = vmatmul.mubr.bf16.gmra.mxu0 %v522
    %v1376 = vpop.f32.mrf.mxu0
    %v1377 = vadd.f32 %v861, %v1376
    %v1378 = vpop.f32.mrf.mxu0
    %v1379 = vpop.f32.mrf.mxu0
    %v1380 = vadd.f32 %v861, %v1379
    %v1381 = vpop.f32.mrf.mxu0
    %1382 = vmatprep.mubr.bf16.mxu0 %v531
    %1383 = vmatmul.mubr.bf16.gmra.mxu0 %v523
    %v1384 = vpop.f32.mrf.mxu0
    %v1385 = vadd.f32 %v861, %v1384
    %v1386 = vpop.f32.mrf.mxu0
    %v1387 = vpop.f32.mrf.mxu0
    %v1388 = vadd.f32 %v861, %v1387
    %v1389 = vpop.f32.mrf.mxu0
    %1390 = vdwg.mxu0
    %1391 = vmatprep.subr.bf16.mxu0 0
    %1392 = vmatpush1.bf16.msra.mxu0 %v1173
    %1393 = vmatprep.subr.bf16.mxu0 0
    %1394 = vmatpush1.bf16.msra.mxu0 %v1172
    %1395 = vmatprep.subr.bf16.mxu0 0
    %1396 = vmatpush1.bf16.msra.mxu0 %v1171
    %1397 = vmatprep.subr.bf16.mxu0 0
    %1398 = vmatpush1.bf16.msra.mxu0 %v1170
    %1399 = vmatprep.subr.bf16.mxu0 0
    %1400 = vmatpush1.bf16.msra.mxu0 %v1169
    %1401 = vmatprep.subr.bf16.mxu0 0
    %1402 = vmatpush1.bf16.msra.mxu0 %v1168
    %1403 = vmatprep.subr.bf16.mxu0 0
    %1404 = vmatpush1.bf16.msra.mxu0 %v1167
    %1405 = vmatprep.subr.bf16.mxu0 0
    %1406 = vmatpush1.bf16.msra.mxu0 %v1166
    %1407 = vmatprep.subr.bf16.mxu0 0
    %1408 = vmatpush2.bf16.msra.mxu0 %v1181
    %1409 = vmatprep.subr.bf16.mxu0 0
    %1410 = vmatpush2.bf16.msra.mxu0 %v1180
    %1411 = vmatprep.subr.bf16.mxu0 0
    %1412 = vmatpush2.bf16.msra.mxu0 %v1179
    %1413 = vmatprep.subr.bf16.mxu0 0
    %1414 = vmatpush2.bf16.msra.mxu0 %v1178
    %1415 = vmatprep.subr.bf16.mxu0 0
    %1416 = vmatpush2.bf16.msra.mxu0 %v1177
    %1417 = vmatprep.subr.bf16.mxu0 0
    %1418 = vmatpush2.bf16.msra.mxu0 %v1176
    %1419 = vmatprep.subr.bf16.mxu0 0
    %1420 = vmatpush2.bf16.msra.mxu0 %v1175
    %1421 = vmatprep.subr.bf16.mxu0 0
    %1422 = vmatpush2.bf16.msra.mxu0 %v1174
    %1423 = vmatprep.mubr.bf16.mxu0 %v609
    %1424 = vmatmul.mubr.bf16.gmra.mxu0 %v579
    %v1425 = vpop.f32.mrf.mxu0
    %v1426 = vadd.f32 %v1329, %v1425
    %v1427 = vpop.f32.mrf.mxu0
    %v1428 = vpop.f32.mrf.mxu0
    %v1429 = vadd.f32 %v1332, %v1428
    %v1430 = vpop.f32.mrf.mxu0
    %1431 = vmatprep.mubr.bf16.mxu0 %v610
    %1432 = vmatmul.mubr.bf16.gmra.mxu0 %v580
    %v1433 = vpop.f32.mrf.mxu0
    %v1434 = vadd.f32 %v1337, %v1433
    %v1435 = vpop.f32.mrf.mxu0
    %v1436 = vpop.f32.mrf.mxu0
    %v1437 = vadd.f32 %v1340, %v1436
    %v1438 = vpop.f32.mrf.mxu0
    %1439 = vmatprep.mubr.bf16.mxu0 %v611
    %1440 = vmatmul.mubr.bf16.gmra.mxu0 %v581
    %v1441 = vpop.f32.mrf.mxu0
    %v1442 = vadd.f32 %v1345, %v1441
    %v1443 = vpop.f32.mrf.mxu0
    %v1444 = vpop.f32.mrf.mxu0
    %v1445 = vadd.f32 %v1348, %v1444
    %v1446 = vpop.f32.mrf.mxu0
    %1447 = vmatprep.mubr.bf16.mxu0 %v612
    %1448 = vmatmul.mubr.bf16.gmra.mxu0 %v582
    %v1449 = vpop.f32.mrf.mxu0
    %v1450 = vadd.f32 %v1353, %v1449
    %v1451 = vpop.f32.mrf.mxu0
    %v1452 = vpop.f32.mrf.mxu0
    %v1453 = vadd.f32 %v1356, %v1452
    %v1454 = vpop.f32.mrf.mxu0
    %1455 = vmatprep.mubr.bf16.mxu0 %v613
    %1456 = vmatmul.mubr.bf16.gmra.mxu0 %v583
    %v1457 = vpop.f32.mrf.mxu0
    %v1458 = vadd.f32 %v1361, %v1457
    %v1459 = vpop.f32.mrf.mxu0
    %v1460 = vpop.f32.mrf.mxu0
    %v1461 = vadd.f32 %v1364, %v1460
    %v1462 = vpop.f32.mrf.mxu0
    %1463 = vmatprep.mubr.bf16.mxu0 %v614
    %1464 = vmatmul.mubr.bf16.gmra.mxu0 %v584
    %v1465 = vpop.f32.mrf.mxu0
    %v1466 = vadd.f32 %v1369, %v1465
    %v1467 = vpop.f32.mrf.mxu0
    %v1468 = vpop.f32.mrf.mxu0
    %v1469 = vadd.f32 %v1372, %v1468
    %v1470 = vpop.f32.mrf.mxu0
    %1471 = vmatprep.mubr.bf16.mxu0 %v615
    %1472 = vmatmul.mubr.bf16.gmra.mxu0 %v585
    %v1473 = vpop.f32.mrf.mxu0
    %v1474 = vadd.f32 %v1377, %v1473
    %v1475 = vpop.f32.mrf.mxu0
    %v1476 = vpop.f32.mrf.mxu0
    %v1477 = vadd.f32 %v1380, %v1476
    %v1478 = vpop.f32.mrf.mxu0
    %1479 = vmatprep.mubr.bf16.mxu0 %v616
    %1480 = vmatmul.mubr.bf16.gmra.mxu0 %v586
    %v1481 = vpop.f32.mrf.mxu0
    %v1482 = vadd.f32 %v1385, %v1481
    %v1483 = vpop.f32.mrf.mxu0
    %v1484 = vpop.f32.mrf.mxu0
    %v1485 = vadd.f32 %v1388, %v1484
    %v1486 = vpop.f32.mrf.mxu0
    %1487 = vdwg.mxu0
    %1488 = vmatprep.subr.bf16.mxu0 0
    %1489 = vmatpush1.bf16.msra.mxu0 %v1189
    %1490 = vmatprep.subr.bf16.mxu0 0
    %1491 = vmatpush1.bf16.msra.mxu0 %v1188
    %1492 = vmatprep.subr.bf16.mxu0 0
    %1493 = vmatpush1.bf16.msra.mxu0 %v1187
    %1494 = vmatprep.subr.bf16.mxu0 0
    %1495 = vmatpush1.bf16.msra.mxu0 %v1186
    %1496 = vmatprep.subr.bf16.mxu0 0
    %1497 = vmatpush1.bf16.msra.mxu0 %v1185
    %1498 = vmatprep.subr.bf16.mxu0 0
    %1499 = vmatpush1.bf16.msra.mxu0 %v1184
    %1500 = vmatprep.subr.bf16.mxu0 0
    %1501 = vmatpush1.bf16.msra.mxu0 %v1183
    %1502 = vmatprep.subr.bf16.mxu0 0
    %1503 = vmatpush1.bf16.msra.mxu0 %v1182
    %1504 = vmatprep.subr.bf16.mxu0 0
    %1505 = vmatpush2.bf16.msra.mxu0 %v1197
    %1506 = vmatprep.subr.bf16.mxu0 0
    %1507 = vmatpush2.bf16.msra.mxu0 %v1196
    %1508 = vmatprep.subr.bf16.mxu0 0
    %1509 = vmatpush2.bf16.msra.mxu0 %v1195
    %1510 = vmatprep.subr.bf16.mxu0 0
    %1511 = vmatpush2.bf16.msra.mxu0 %v1194
    %1512 = vmatprep.subr.bf16.mxu0 0
    %1513 = vmatpush2.bf16.msra.mxu0 %v1193
    %1514 = vmatprep.subr.bf16.mxu0 0
    %1515 = vmatpush2.bf16.msra.mxu0 %v1192
    %1516 = vmatprep.subr.bf16.mxu0 0
    %1517 = vmatpush2.bf16.msra.mxu0 %v1191
    %1518 = vmatprep.subr.bf16.mxu0 0
    %1519 = vmatpush2.bf16.msra.mxu0 %v1190
    %1520 = vmatprep.mubr.bf16.mxu0 %v647
    %1521 = vmatmul.mubr.bf16.gmra.mxu0 %v617
    %v1522 = vpop.f32.mrf.mxu0
    %v1523 = vadd.f32 %v1426, %v1522
    %v1524 = vpop.f32.mrf.mxu0
    %v1525 = vpop.f32.mrf.mxu0
    %v1526 = vadd.f32 %v1429, %v1525
    %v1527 = vpop.f32.mrf.mxu0
    %1528 = vmatprep.mubr.bf16.mxu0 %v648
    %1529 = vmatmul.mubr.bf16.gmra.mxu0 %v618
    %v1530 = vpop.f32.mrf.mxu0
    %v1531 = vadd.f32 %v1434, %v1530
    %v1532 = vpop.f32.mrf.mxu0
    %v1533 = vpop.f32.mrf.mxu0
    %v1534 = vadd.f32 %v1437, %v1533
    %v1535 = vpop.f32.mrf.mxu0
    %1536 = vmatprep.mubr.bf16.mxu0 %v649
    %1537 = vmatmul.mubr.bf16.gmra.mxu0 %v619
    %v1538 = vpop.f32.mrf.mxu0
    %v1539 = vadd.f32 %v1442, %v1538
    %v1540 = vpop.f32.mrf.mxu0
    %v1541 = vpop.f32.mrf.mxu0
    %v1542 = vadd.f32 %v1445, %v1541
    %v1543 = vpop.f32.mrf.mxu0
    %1544 = vmatprep.mubr.bf16.mxu0 %v650
    %1545 = vmatmul.mubr.bf16.gmra.mxu0 %v620
    %v1546 = vpop.f32.mrf.mxu0
    %v1547 = vadd.f32 %v1450, %v1546
    %v1548 = vpop.f32.mrf.mxu0
    %v1549 = vpop.f32.mrf.mxu0
    %v1550 = vadd.f32 %v1453, %v1549
    %v1551 = vpop.f32.mrf.mxu0
    %1552 = vmatprep.mubr.bf16.mxu0 %v651
    %1553 = vmatmul.mubr.bf16.gmra.mxu0 %v621
    %v1554 = vpop.f32.mrf.mxu0
    %v1555 = vadd.f32 %v1458, %v1554
    %v1556 = vpop.f32.mrf.mxu0
    %v1557 = vpop.f32.mrf.mxu0
    %v1558 = vadd.f32 %v1461, %v1557
    %v1559 = vpop.f32.mrf.mxu0
    %1560 = vmatprep.mubr.bf16.mxu0 %v652
    %1561 = vmatmul.mubr.bf16.gmra.mxu0 %v622
    %v1562 = vpop.f32.mrf.mxu0
    %v1563 = vadd.f32 %v1466, %v1562
    %v1564 = vpop.f32.mrf.mxu0
    %v1565 = vpop.f32.mrf.mxu0
    %v1566 = vadd.f32 %v1469, %v1565
    %v1567 = vpop.f32.mrf.mxu0
    %1568 = vmatprep.mubr.bf16.mxu0 %v653
    %1569 = vmatmul.mubr.bf16.gmra.mxu0 %v623
    %v1570 = vpop.f32.mrf.mxu0
    %v1571 = vadd.f32 %v1474, %v1570
    %v1572 = vpop.f32.mrf.mxu0
    %v1573 = vpop.f32.mrf.mxu0
    %v1574 = vadd.f32 %v1477, %v1573
    %v1575 = vpop.f32.mrf.mxu0
    %1576 = vmatprep.mubr.bf16.mxu0 %v654
    %1577 = vmatmul.mubr.bf16.gmra.mxu0 %v624
    %v1578 = vpop.f32.mrf.mxu0
    %v1579 = vadd.f32 %v1482, %v1578
    %v1580 = vpop.f32.mrf.mxu0
    %v1581 = vpop.f32.mrf.mxu0
    %v1582 = vadd.f32 %v1485, %v1581
    %v1583 = vpop.f32.mrf.mxu0
    %1584 = vdwg.mxu0
    %1585 = vmatprep.subr.bf16.mxu0 0
    %1586 = vmatpush1.bf16.msra.mxu0 %v1205
    %1587 = vmatprep.subr.bf16.mxu0 0
    %1588 = vmatpush1.bf16.msra.mxu0 %v1204
    %1589 = vmatprep.subr.bf16.mxu0 0
    %1590 = vmatpush1.bf16.msra.mxu0 %v1203
    %1591 = vmatprep.subr.bf16.mxu0 0
    %1592 = vmatpush1.bf16.msra.mxu0 %v1202
    %1593 = vmatprep.subr.bf16.mxu0 0
    %1594 = vmatpush1.bf16.msra.mxu0 %v1201
    %1595 = vmatprep.subr.bf16.mxu0 0
    %1596 = vmatpush1.bf16.msra.mxu0 %v1200
    %1597 = vmatprep.subr.bf16.mxu0 0
    %1598 = vmatpush1.bf16.msra.mxu0 %v1199
    %1599 = vmatprep.subr.bf16.mxu0 0
    %1600 = vmatpush1.bf16.msra.mxu0 %v1198
    %1601 = vmatprep.subr.bf16.mxu0 0
    %1602 = vmatpush2.bf16.msra.mxu0 %v1213
    %1603 = vmatprep.subr.bf16.mxu0 0
    %1604 = vmatpush2.bf16.msra.mxu0 %v1212
    %1605 = vmatprep.subr.bf16.mxu0 0
    %1606 = vmatpush2.bf16.msra.mxu0 %v1211
    %1607 = vmatprep.subr.bf16.mxu0 0
    %1608 = vmatpush2.bf16.msra.mxu0 %v1210
    %1609 = vmatprep.subr.bf16.mxu0 0
    %1610 = vmatpush2.bf16.msra.mxu0 %v1209
    %1611 = vmatprep.subr.bf16.mxu0 0
    %1612 = vmatpush2.bf16.msra.mxu0 %v1208
    %1613 = vmatprep.subr.bf16.mxu0 0
    %1614 = vmatpush2.bf16.msra.mxu0 %v1207
    %1615 = vmatprep.subr.bf16.mxu0 0
    %1616 = vmatpush2.bf16.msra.mxu0 %v1206
    %1617 = vmatprep.mubr.bf16.mxu0 %v525
    %1618 = vmatmul.mubr.bf16.gmra.mxu0 %v675
    %v1619 = vpop.f32.mrf.mxu0
    %v1620 = vadd.f32 %v1523, %v1619
    %v1621 = vpop.f32.mrf.mxu0
    %v1622 = vpop.f32.mrf.mxu0
    %v1623 = vadd.f32 %v1526, %v1622
    %v1624 = vpop.f32.mrf.mxu0
    %1625 = vmatprep.mubr.bf16.mxu0 %v526
    %1626 = vmatmul.mubr.bf16.gmra.mxu0 %v676
    %v1627 = vpop.f32.mrf.mxu0
    %v1628 = vadd.f32 %v1531, %v1627
    %v1629 = vpop.f32.mrf.mxu0
    %v1630 = vpop.f32.mrf.mxu0
    %v1631 = vadd.f32 %v1534, %v1630
    %v1632 = vpop.f32.mrf.mxu0
    %1633 = vmatprep.mubr.bf16.mxu0 %v527
    %1634 = vmatmul.mubr.bf16.gmra.mxu0 %v677
    %v1635 = vpop.f32.mrf.mxu0
    %v1636 = vadd.f32 %v1539, %v1635
    %v1637 = vpop.f32.mrf.mxu0
    %v1638 = vpop.f32.mrf.mxu0
    %v1639 = vadd.f32 %v1542, %v1638
    %v1640 = vpop.f32.mrf.mxu0
    %1641 = vmatprep.mubr.bf16.mxu0 %v683
    %1642 = vmatmul.mubr.bf16.gmra.mxu0 %v678
    %v1643 = vpop.f32.mrf.mxu0
    %v1644 = vadd.f32 %v1547, %v1643
    %v1645 = vpop.f32.mrf.mxu0
    %v1646 = vpop.f32.mrf.mxu0
    %v1647 = vadd.f32 %v1550, %v1646
    %v1648 = vpop.f32.mrf.mxu0
    %1649 = vmatprep.mubr.bf16.mxu0 %v529
    %1650 = vmatmul.mubr.bf16.gmra.mxu0 %v679
    %v1651 = vpop.f32.mrf.mxu0
    %v1652 = vadd.f32 %v1555, %v1651
    %v1653 = vpop.f32.mrf.mxu0
    %v1654 = vpop.f32.mrf.mxu0
    %v1655 = vadd.f32 %v1558, %v1654
    %v1656 = vpop.f32.mrf.mxu0
    %1657 = vmatprep.mubr.bf16.mxu0 %v530
    %1658 = vmatmul.mubr.bf16.gmra.mxu0 %v680
    %v1659 = vpop.f32.mrf.mxu0
    %v1660 = vadd.f32 %v1563, %v1659
    %v1661 = vpop.f32.mrf.mxu0
    %v1662 = vpop.f32.mrf.mxu0
    %v1663 = vadd.f32 %v1566, %v1662
    %v1664 = vpop.f32.mrf.mxu0
    %1665 = vmatprep.mubr.bf16.mxu0 %v531
    %1666 = vmatmul.mubr.bf16.gmra.mxu0 %v681
    %v1667 = vpop.f32.mrf.mxu0
    %v1668 = vadd.f32 %v1571, %v1667
    %v1669 = vpop.f32.mrf.mxu0
    %v1670 = vpop.f32.mrf.mxu0
    %v1671 = vadd.f32 %v1574, %v1670
    %v1672 = vpop.f32.mrf.mxu0
    %1673 = vmatprep.mubr.bf16.mxu0 %v684
    %1674 = vmatmul.mubr.bf16.gmra.mxu0 %v682
    %v1675 = vpop.f32.mrf.mxu0
    %v1676 = vadd.f32 %v1579, %v1675
    %v1677 = vpop.f32.mrf.mxu0
    %v1678 = vpop.f32.mrf.mxu0
    %v1679 = vadd.f32 %v1582, %v1678
    %v1680 = vpop.f32.mrf.mxu0
    %1681 = vdwg.mxu0
    %1682 = vmatprep.subr.bf16.mxu0 0
    %1683 = vmatpush1.bf16.msra.mxu0 %v1221
    %1684 = vmatprep.subr.bf16.mxu0 0
    %1685 = vmatpush1.bf16.msra.mxu0 %v1220
    %1686 = vmatprep.subr.bf16.mxu0 0
    %1687 = vmatpush1.bf16.msra.mxu0 %v1219
    %1688 = vmatprep.subr.bf16.mxu0 0
    %1689 = vmatpush1.bf16.msra.mxu0 %v1218
    %1690 = vmatprep.subr.bf16.mxu0 0
    %1691 = vmatpush1.bf16.msra.mxu0 %v1217
    %1692 = vmatprep.subr.bf16.mxu0 0
    %1693 = vmatpush1.bf16.msra.mxu0 %v1216
    %1694 = vmatprep.subr.bf16.mxu0 0
    %1695 = vmatpush1.bf16.msra.mxu0 %v1215
    %1696 = vmatprep.subr.bf16.mxu0 0
    %1697 = vmatpush1.bf16.msra.mxu0 %v1214
    %1698 = vmatprep.subr.bf16.mxu0 0
    %1699 = vmatpush2.bf16.msra.mxu0 0
    %1700 = vmatprep.subr.bf16.mxu0 0
    %1701 = vmatpush2.bf16.msra.mxu0 0
    %1702 = vmatprep.subr.bf16.mxu0 0
    %1703 = vmatpush2.bf16.msra.mxu0 0
    %1704 = vmatprep.subr.bf16.mxu0 0
    %1705 = vmatpush2.bf16.msra.mxu0 0
    %1706 = vmatprep.subr.bf16.mxu0 0
    %1707 = vmatpush2.bf16.msra.mxu0 0
    %1708 = vmatprep.subr.bf16.mxu0 0
    %1709 = vmatpush2.bf16.msra.mxu0 0
    %1710 = vmatprep.subr.bf16.mxu0 0
    %1711 = vmatpush2.bf16.msra.mxu0 0
    %1712 = vmatprep.subr.bf16.mxu0 0
    %1713 = vmatpush2.bf16.msra.mxu0 0
    %1714 = vmatprep.mubr.bf16.mxu0 0
    %1715 = vmatmul.mubr.bf16.gmra.mxu0 %v705
    %v1716 = vpop.f32.mrf.mxu0
    %v1717 = vadd.f32 %v1620, %v1716
    %v1718 = vpop.f32.mrf.mxu0
    %v1719 = vpop.f32.mrf.mxu0
    %v1720 = vadd.f32 %v1623, %v1719
    %v1721 = vpop.f32.mrf.mxu0
    %1722 = vmatprep.mubr.bf16.mxu0 0
    %1723 = vmatmul.mubr.bf16.gmra.mxu0 %v706
    %v1724 = vpop.f32.mrf.mxu0
    %v1725 = vadd.f32 %v1628, %v1724
    %v1726 = vpop.f32.mrf.mxu0
    %v1727 = vpop.f32.mrf.mxu0
    %v1728 = vadd.f32 %v1631, %v1727
    %v1729 = vpop.f32.mrf.mxu0
    %1730 = vmatprep.mubr.bf16.mxu0 0
    %1731 = vmatmul.mubr.bf16.gmra.mxu0 %v707
    %v1732 = vpop.f32.mrf.mxu0
    %v1733 = vadd.f32 %v1636, %v1732
    %v1734 = vpop.f32.mrf.mxu0
    %v1735 = vpop.f32.mrf.mxu0
    %v1736 = vadd.f32 %v1639, %v1735
    %v1737 = vpop.f32.mrf.mxu0
    %1738 = vmatprep.mubr.bf16.mxu0 0
    %1739 = vmatmul.mubr.bf16.gmra.mxu0 %v708
    %v1740 = vpop.f32.mrf.mxu0
    %v1741 = vadd.f32 %v1644, %v1740
    %v1742 = vpop.f32.mrf.mxu0
    %v1743 = vpop.f32.mrf.mxu0
    %v1744 = vadd.f32 %v1647, %v1743
    %v1745 = vpop.f32.mrf.mxu0
    %1746 = vmatprep.mubr.bf16.mxu0 0
    %1747 = vmatmul.mubr.bf16.gmra.mxu0 %v709
    %v1748 = vpop.f32.mrf.mxu0
    %v1749 = vadd.f32 %v1652, %v1748
    %v1750 = vpop.f32.mrf.mxu0
    %v1751 = vpop.f32.mrf.mxu0
    %v1752 = vadd.f32 %v1655, %v1751
    %v1753 = vpop.f32.mrf.mxu0
    %1754 = vmatprep.mubr.bf16.mxu0 0
    %1755 = vmatmul.mubr.bf16.gmra.mxu0 %v710
    %v1756 = vpop.f32.mrf.mxu0
    %v1757 = vadd.f32 %v1660, %v1756
    %v1758 = vpop.f32.mrf.mxu0
    %v1759 = vpop.f32.mrf.mxu0
    %v1760 = vadd.f32 %v1663, %v1759
    %v1761 = vpop.f32.mrf.mxu0
    %1762 = vmatprep.mubr.bf16.mxu0 0
    %1763 = vmatmul.mubr.bf16.gmra.mxu0 %v711
    %v1764 = vpop.f32.mrf.mxu0
    %v1765 = vadd.f32 %v1668, %v1764
    %v1766 = vpop.f32.mrf.mxu0
    %v1767 = vpop.f32.mrf.mxu0
    %v1768 = vadd.f32 %v1671, %v1767
    %v1769 = vpop.f32.mrf.mxu0
    %1770 = vmatprep.mubr.bf16.mxu0 0
    %1771 = vmatmul.mubr.bf16.gmra.mxu0 %v712
    %v1772 = vpop.f32.mrf.mxu0
    %v1773 = vadd.f32 %v1676, %v1772
    %v1774 = vpop.f32.mrf.mxu0
    %v1775 = vpop.f32.mrf.mxu0
    %v1776 = vadd.f32 %v1679, %v1775
    %v1777 = vpop.f32.mrf.mxu0
    %1778 = vdwg.mxu0
    %v1779 = vmax.f32 %v1717, 0.0
    %v1780 = vmax.f32 %v1720, 0.0
    %v1781 = vmax.f32 %v1725, 0.0
    %v1782 = vmax.f32 %v1728, 0.0
    %v1783 = vmax.f32 %v1733, 0.0
    %v1784 = vmax.f32 %v1736, 0.0
    %v1785 = vmax.f32 %v1741, 0.0
    %v1786 = vmax.f32 %v1744, 0.0
    %v1787 = vmax.f32 %v1749, 0.0
    %v1788 = vmax.f32 %v1752, 0.0
    %v1789 = vmax.f32 %v1757, 0.0
    %v1790 = vmax.f32 %v1760, 0.0
    %v1791 = vmax.f32 %v1765, 0.0
    %v1792 = vmax.f32 %v1768, 0.0
    %v1793 = vmax.f32 %v1773, 0.0
    %v1794 = vmax.f32 %v1776, 0.0
    %v1795 = vpack.c.bf16 %v1780, %v1779
    %v1796 = vpack.c.bf16 %v1782, %v1781
    %v1797 = vpack.c.bf16 %v1784, %v1783
    %v1798 = vpack.c.bf16 %v1786, %v1785
    %v1799 = vpack.c.bf16 %v1788, %v1787
    %v1800 = vpack.c.bf16 %v1790, %v1789
    %v1801 = vpack.c.bf16 %v1792, %v1791
    %v1802 = vpack.c.bf16 %v1794, %v1793
    %v1803 = vld [vmem:[%s3] sm:$0xf]
    %v1804 = vld [vmem:[%s3 + $0x4] sm:$0xf]
    %v1805 = vld [vmem:[%s3 + $0x8] sm:$0xf]
    %v1806 = vld [vmem:[%s3 + $0xc] sm:$0xf]
    %v1807 = vld [vmem:[%s3 + $0x10] sm:$0xf]
    %v1808 = vld [vmem:[%s3 + $0x14] sm:$0xf]
    %v1809 = vld [vmem:[%s3 + $0x18] sm:$0xf]
    %v1810 = vld [vmem:[%s3 + $0x1c] sm:$0xf]
    %v1811 = vld [vmem:[%s3 + $0x20] sm:$0xf]
    %v1812 = vld [vmem:[%s3 + $0x24] sm:$0xf]
    %v1813 = vld [vmem:[%s3 + $0x28] sm:$0xf]
    %v1814 = vld [vmem:[%s3 + $0x2c] sm:$0xf]
    %v1815 = vld [vmem:[%s3 + $0x30] sm:$0xf]
    %v1816 = vld [vmem:[%s3 + $0x34] sm:$0xf]
    %v1817 = vld [vmem:[%s3 + $0x38] sm:$0xf]
    %v1818 = vld [vmem:[%s3 + $0x3c] sm:$0xf]
    %v1819 = vld [vmem:[%s4 + $0x2] sm:$0x1]
    %v1820 = vlaneseq
    %v1821 = vshrl.u32 %v1820, 7
    %v1822 = vsub.s32 0, %v1821
    %v1823 = vrot.slane %v1819, %v1822
    %v1840 = vunpack.c.l.b16 %v1803
    %v1841 = vunpack.c.l.b16 %v1804
    %v1842 = vunpack.c.l.b16 %v1805
    %v1843 = vunpack.c.l.b16 %v1806
    %v1844 = vunpack.c.l.b16 %v1807
    %v1845 = vunpack.c.l.b16 %v1808
    %v1846 = vunpack.c.l.b16 %v1809
    %v1847 = vunpack.c.l.b16 %v1810
    %v1848 = vunpack.c.l.b16 %v1811
    %v1849 = vunpack.c.l.b16 %v1812
    %v1850 = vunpack.c.l.b16 %v1813
    %v1851 = vunpack.c.l.b16 %v1814
    %v1852 = vunpack.c.l.b16 %v1815
    %v1853 = vunpack.c.l.b16 %v1816
    %v1854 = vunpack.c.l.b16 %v1817
    %v1855 = vunpack.c.l.b16 %v1818
    %v1856 = vpack.c.b16 %v1841, %v1840
    %v1857 = vpack.c.b16 %v1843, %v1842
    %v1858 = vpack.c.b16 %v1845, %v1844
    %v1859 = vpack.c.b16 %v1847, %v1846
    %v1860 = vpack.c.b16 %v1849, %v1848
    %v1861 = vpack.c.b16 %v1851, %v1850
    %v1862 = vpack.c.b16 %v1853, %v1852
    %v1863 = vpack.c.b16 %v1855, %v1854
    %1872 = vmatprep.subr.bf16.mxu0 0
    %1873 = vmatpush1.bf16.msra.mxu0 %v1863
    %1874 = vmatprep.subr.bf16.mxu0 0
    %1875 = vmatpush1.bf16.msra.mxu0 %v1862
    %1876 = vmatprep.subr.bf16.mxu0 0
    %1877 = vmatpush1.bf16.msra.mxu0 %v1861
    %1878 = vmatprep.subr.bf16.mxu0 0
    %1879 = vmatpush1.bf16.msra.mxu0 %v1860
    %1880 = vmatprep.subr.bf16.mxu0 0
    %1881 = vmatpush1.bf16.msra.mxu0 %v1859
    %1882 = vmatprep.subr.bf16.mxu0 0
    %1883 = vmatpush1.bf16.msra.mxu0 %v1858
    %1884 = vmatprep.subr.bf16.mxu0 0
    %1885 = vmatpush1.bf16.msra.mxu0 %v1857
    %1886 = vmatprep.subr.bf16.mxu0 0
    %1887 = vmatpush1.bf16.msra.mxu0 %v1856
    %1888 = vmatprep.subr.bf16.mxu0 0
    %1889 = vmatpush2.bf16.msra.mxu0 0
    %1890 = vmatprep.subr.bf16.mxu0 0
    %1891 = vmatpush2.bf16.msra.mxu0 0
    %1892 = vmatprep.subr.bf16.mxu0 0
    %1893 = vmatpush2.bf16.msra.mxu0 0
    %1894 = vmatprep.subr.bf16.mxu0 0
    %1895 = vmatpush2.bf16.msra.mxu0 0
    %1896 = vmatprep.subr.bf16.mxu0 0
    %1897 = vmatpush2.bf16.msra.mxu0 0
    %1898 = vmatprep.subr.bf16.mxu0 0
    %1899 = vmatpush2.bf16.msra.mxu0 0
    %1900 = vmatprep.subr.bf16.mxu0 0
    %1901 = vmatpush2.bf16.msra.mxu0 0
    %1902 = vmatprep.subr.bf16.mxu0 0
    %1903 = vmatpush2.bf16.msra.mxu0 0
    %1904 = vmatprep.mubr.bf16.mxu0 0
    %1905 = vmatmul.mubr.bf16.gmra.mxu0 %v1795
    %v1906 = vpop.f32.mrf.mxu0
    %v1907 = vadd.f32 %v1823, %v1906
    %v1908 = vpop.f32.mrf.mxu0
    %v1909 = vpop.f32.mrf.mxu0
    %v1910 = vadd.f32 %v1823, %v1909
    %v1911 = vpop.f32.mrf.mxu0
    %1912 = vmatprep.mubr.bf16.mxu0 0
    %1913 = vmatmul.mubr.bf16.gmra.mxu0 %v1796
    %v1914 = vpop.f32.mrf.mxu0
    %v1915 = vadd.f32 %v1823, %v1914
    %v1916 = vpop.f32.mrf.mxu0
    %v1917 = vpop.f32.mrf.mxu0
    %v1918 = vadd.f32 %v1823, %v1917
    %v1919 = vpop.f32.mrf.mxu0
    %1920 = vmatprep.mubr.bf16.mxu0 0
    %1921 = vmatmul.mubr.bf16.gmra.mxu0 %v1797
    %v1922 = vpop.f32.mrf.mxu0
    %v1923 = vadd.f32 %v1823, %v1922
    %v1924 = vpop.f32.mrf.mxu0
    %v1925 = vpop.f32.mrf.mxu0
    %v1926 = vadd.f32 %v1823, %v1925
    %v1927 = vpop.f32.mrf.mxu0
    %1928 = vmatprep.mubr.bf16.mxu0 0
    %1929 = vmatmul.mubr.bf16.gmra.mxu0 %v1798
    %v1930 = vpop.f32.mrf.mxu0
    %v1931 = vadd.f32 %v1823, %v1930
    %v1932 = vpop.f32.mrf.mxu0
    %v1933 = vpop.f32.mrf.mxu0
    %v1934 = vadd.f32 %v1823, %v1933
    %v1935 = vpop.f32.mrf.mxu0
    %1936 = vmatprep.mubr.bf16.mxu0 0
    %1937 = vmatmul.mubr.bf16.gmra.mxu0 %v1799
    %v1938 = vpop.f32.mrf.mxu0
    %v1939 = vadd.f32 %v1823, %v1938
    %v1940 = vpop.f32.mrf.mxu0
    %v1941 = vpop.f32.mrf.mxu0
    %v1942 = vadd.f32 %v1823, %v1941
    %v1943 = vpop.f32.mrf.mxu0
    %1944 = vmatprep.mubr.bf16.mxu0 0
    %1945 = vmatmul.mubr.bf16.gmra.mxu0 %v1800
    %v1946 = vpop.f32.mrf.mxu0
    %v1947 = vadd.f32 %v1823, %v1946
    %v1948 = vpop.f32.mrf.mxu0
    %v1949 = vpop.f32.mrf.mxu0
    %v1950 = vadd.f32 %v1823, %v1949
    %v1951 = vpop.f32.mrf.mxu0
    %1952 = vmatprep.mubr.bf16.mxu0 0
    %1953 = vmatmul.mubr.bf16.gmra.mxu0 %v1801
    %v1954 = vpop.f32.mrf.mxu0
    %v1955 = vadd.f32 %v1823, %v1954
    %v1956 = vpop.f32.mrf.mxu0
    %v1957 = vpop.f32.mrf.mxu0
    %v1958 = vadd.f32 %v1823, %v1957
    %v1959 = vpop.f32.mrf.mxu0
    %1960 = vmatprep.mubr.bf16.mxu0 0
    %1961 = vmatmul.mubr.bf16.gmra.mxu0 %v1802
    %v1962 = vpop.f32.mrf.mxu0
    %v1963 = vadd.f32 %v1823, %v1962
    %v1964 = vpop.f32.mrf.mxu0
    %v1965 = vpop.f32.mrf.mxu0
    %v1966 = vadd.f32 %v1823, %v1965
    %v1967 = vpop.f32.mrf.mxu0
    %1968 = vdwg.mxu0
    %v1969 = vadd.f32 %v1907, %v22
    %v1970 = vadd.f32 %v1910, %v23
    %v1971 = vadd.f32 %v1915, %v24
    %v1972 = vadd.f32 %v1918, %v25
    %v1973 = vadd.f32 %v1923, %v26
    %v1974 = vadd.f32 %v1926, %v27
    %v1975 = vadd.f32 %v1931, %v28
    %v1976 = vadd.f32 %v1934, %v29
    %v1977 = vadd.f32 %v1939, %v30
    %v1978 = vadd.f32 %v1942, %v31
    %v1979 = vadd.f32 %v1947, %v32
    %v1980 = vadd.f32 %v1950, %v33
    %v1981 = vadd.f32 %v1955, %v34
    %v1982 = vadd.f32 %v1958, %v35
    %v1983 = vadd.f32 %v1963, %v36
    %v1984 = vadd.f32 %v1966, %v37
    %v1985 = vmax.f32 %v1969, 0.0
    %v1986 = vmax.f32 %v1970, 0.0
    %v1987 = vmax.f32 %v1971, 0.0
    %v1988 = vmax.f32 %v1972, 0.0
    %v1989 = vmax.f32 %v1973, 0.0
    %v1990 = vmax.f32 %v1974, 0.0
    %v1991 = vmax.f32 %v1975, 0.0
    %v1992 = vmax.f32 %v1976, 0.0
    %v1993 = vmax.f32 %v1977, 0.0
    %v1994 = vmax.f32 %v1978, 0.0
    %v1995 = vmax.f32 %v1979, 0.0
    %v1996 = vmax.f32 %v1980, 0.0
    %v1997 = vmax.f32 %v1981, 0.0
    %v1998 = vmax.f32 %v1982, 0.0
    %v1999 = vmax.f32 %v1983, 0.0
    %v2000 = vmax.f32 %v1984, 0.0
    %2001 = vst [vmem:[#allocation2] sm:$0xff] %v1985
    %2002 = vst [vmem:[#allocation2 + $0x8] sm:$0xff] %v1986
    %2003 = vst [vmem:[#allocation2 + $0x10] sm:$0xff] %v1987
    %2004 = vst [vmem:[#allocation2 + $0x18] sm:$0xff] %v1988
    %2005 = vst [vmem:[#allocation2 + $0x20] sm:$0xff] %v1989
    %2006 = vst [vmem:[#allocation2 + $0x28] sm:$0xff] %v1990
    %2007 = vst [vmem:[#allocation2 + $0x30] sm:$0xff] %v1991
    %2008 = vst [vmem:[#allocation2 + $0x38] sm:$0xff] %v1992
    %2009 = vst [vmem:[#allocation2 + $0x40] sm:$0xff] %v1993
    %2010 = vst [vmem:[#allocation2 + $0x48] sm:$0xff] %v1994
    %2011 = vst [vmem:[#allocation2 + $0x50] sm:$0xff] %v1995
    %2012 = vst [vmem:[#allocation2 + $0x58] sm:$0xff] %v1996
    %2013 = vst [vmem:[#allocation2 + $0x60] sm:$0xff] %v1997
    %2014 = vst [vmem:[#allocation2 + $0x68] sm:$0xff] %v1998
    %2015 = vst [vmem:[#allocation2 + $0x70] sm:$0xff] %v1999
    %2016 = vst [vmem:[#allocation2 + $0x78] sm:$0xff] %v2000
    // Predicated region
    $region22: #{bottleneckx_forward.1} parent=1 // pred_check
      _
    $region23: #{bottleneckx_forward.1} parent=1 // pred_check_branch
      %2018 = sbr.rel (0) target = $region25
    $region24: #{bottleneckx_forward.1} parent=1 // pred_region
      %s2020 = ssub.s32 2048, 2048
      %2021 = vsyncadd [#allocation3], %s2020
      %s2022 = sshll.u32 [#allocation2], 4
      %s2023 = int_to_ptr.vmem [resolvable:$true] %s2022
      %2028 = dma.vmem_to_hbm [thread:$0]  %s2023, 2048, %s5, [#allocation3], 128, 128, 8
    $region25: #{bottleneckx_forward.1} parent=1 // pred_fallthru
      _
    // Predicated region
    $region26: #{bottleneckx_forward.1} parent=1 // pred_check
      _
    $region27: #{bottleneckx_forward.1} parent=1 // pred_check_branch
      %2030 = sbr.rel (0) target = $region29
    $region28: #{bottleneckx_forward.1} parent=1 // pred_region
      %2031 = dma.done [#allocation3], 2048
    $region29: #{bottleneckx_forward.1} parent=1 // pred_fallthru
      _
    %2032 = vsyncpa [#allocation3], 1

</llo_original>
